<compile_context>
chip_gen: v7x
topology: tpu7x:2x2x1
jax: 0.10.0
libtpu: 0.0.40
codegen_flags: <defaults>
</compile_context>

<pallas_src>
import functools

import numpy as np
import jax
import jax.numpy as jnp
from jax.experimental import pallas as pl
from jax.experimental.pallas import tpu as pltpu

_BN_EPS = 1e-5
_K = 3  # 3x3 KAN convolutions inside BasicBlock


def _round_up(x, m):
    return ((x + m - 1) // m) * m


# ---------------------------------------------------------------------------
# Fused KAN conv kernel: per-element B-spline basis evaluation (streamed into
# a VMEM scratch) + 9 shifted MXU contractions.
# ---------------------------------------------------------------------------
def _kan_conv_kernel(xp_ref, w_ref, o_ref, g_ref, *,
                     knots, degree, num_bases, H, Wq, C_in, domain):
    # xp_ref: (1, C_in, Lq) f32 -- zero-padded image, row-major flat, row stride Wq
    # w_ref : (K*K, C_out, num_bases*C_in) bf16 -- w[k*K+l, o, m*C_in+j]
    # o_ref : (1, C_out, H*Wq) f32  (Wq-W trailing columns per row are garbage)
    # g_ref : VMEM scratch (num_bases*C_in, Lq) f32 -- basis planes
    v = xp_ref[0]                                         # (C_in, Lq)
    if domain != (0.0, 1.0):                              # skip no-op normalize
        v = (v - domain[0]) * (1.0 / (domain[1] - domain[0]))

    # --- Cox-de Boor bases, one final basis at a time (bounded live temps) ---
    t = knots
    for m in range(num_bases):
        Bd = [((v >= t[m + i]) & (v < t[m + i + 1])).astype(jnp.float32)
              for i in range(degree + 1)]
        for d in range(1, degree + 1):
            nxt = []
            for i in range(degree + 1 - d):
                dl = t[m + i + d] - t[m + i]
                dr = t[m + i + d + 1] - t[m + i + 1]
                term = jnp.zeros_like(v)
                if dl > 0.0:
                    term = term + (v - t[m + i]) * (1.0 / dl) * Bd[i]
                if dr > 0.0:
                    term = term + (t[m + i + d + 1] - v) * (1.0 / dr) * Bd[i + 1]
                nxt.append(term)
            Bd = nxt
        g_ref[m * C_in:(m + 1) * C_in, :] = Bd[0]

    # --- 3x3 conv: 9 shifted (C_out x C*M) @ (C*M x H*Wq) contractions ------
    HWq = H * Wq
    C_out = w_ref.shape[1]
    acc = jnp.zeros((C_out, HWq), jnp.float32)
    for k in range(_K):
        for l in range(_K):
            off = k * Wq + l
            patch = g_ref[:, off:off + HWq].astype(jnp.bfloat16)   # (CM, HWq)
            acc = acc + jnp.dot(w_ref[k * _K + l], patch,
                                preferred_element_type=jnp.float32)
    o_ref[0] = acc


def kan_conv(xpad, w_flat, *, knots, degree, num_bases, H, Wq,
             domain=(0.0, 1.0)):
    B, C_in, Lq = xpad.shape
    KK, C_out, CM = w_flat.shape
    HWq = H * Wq
    kern = functools.partial(_kan_conv_kernel, knots=knots, degree=degree,
                             num_bases=num_bases, H=H, Wq=Wq, C_in=C_in,
                             domain=domain)
    return pl.pallas_call(
        kern,
        out_shape=jax.ShapeDtypeStruct((B, C_out, HWq), jnp.float32),
        grid=(B,),
        in_specs=[pl.BlockSpec((1, C_in, Lq), lambda b: (b, 0, 0)),
                  pl.BlockSpec((KK, C_out, CM), lambda b: (0, 0, 0))],
        out_specs=pl.BlockSpec((1, C_out, HWq), lambda b: (b, 0, 0)),
        scratch_shapes=[pltpu.VMEM((CM, Lq), jnp.float32)],
        compiler_params=pltpu.CompilerParams(
            dimension_semantics=("parallel",)),
    )(xpad, w_flat)


# ---------------------------------------------------------------------------
# Fused BatchNorm(+residual)+ReLU kernels (batch statistics over (B, H, W)).
# The lane axis is H*Wq with Wq-W garbage columns per row, masked out of the
# statistics via a {0,1} column mask.
# ---------------------------------------------------------------------------
def _bn_relu_kernel(mask_ref, x_ref, o_ref, *, count):
    x = x_ref[...]                                        # (B, c_tile, HWq)
    msk = mask_ref[...]                                   # (1, 1, HWq)
    s = jnp.sum(jnp.sum(x * msk, axis=2, keepdims=True), axis=0, keepdims=True)
    mean = s * (1.0 / count)
    d = x - mean
    var = jnp.sum(jnp.sum(d * d * msk, axis=2, keepdims=True), axis=0,
                  keepdims=True) * (1.0 / count)
    y = d * jax.lax.rsqrt(var + _BN_EPS)
    o_ref[...] = jnp.maximum(y, 0.0)


def _bn_add_relu_kernel(mask_ref, x_ref, res_ref, o_ref, *, count):
    x = x_ref[...]
    msk = mask_ref[...]
    s = jnp.sum(jnp.sum(x * msk, axis=2, keepdims=True), axis=0, keepdims=True)
    mean = s * (1.0 / count)
    d = x - mean
    var = jnp.sum(jnp.sum(d * d * msk, axis=2, keepdims=True), axis=0,
                  keepdims=True) * (1.0 / count)
    y = d * jax.lax.rsqrt(var + _BN_EPS) + res_ref[...]
    o_ref[...] = jnp.maximum(y, 0.0)


def _bn_call(kernel, count, mask, *arrays):
    B, C, HWq = arrays[0].shape
    c_tile = 8 if (C % 8 == 0) else C      # channel-tiled at realistic widths
    kern = functools.partial(kernel, count=count)
    data_spec = pl.BlockSpec((B, c_tile, HWq), lambda c: (0, c, 0))
    in_specs = ([pl.BlockSpec((1, 1, HWq), lambda c: (0, 0, 0))]
                + [data_spec] * len(arrays))
    return pl.pallas_call(
        kern,
        out_shape=jax.ShapeDtypeStruct((B, C, HWq), jnp.float32),
        grid=(C // c_tile,),
        in_specs=in_specs,
        out_specs=data_spec,
        compiler_params=pltpu.CompilerParams(
            dimension_semantics=("parallel",)),
    )(mask, *arrays)


# ---------------------------------------------------------------------------
# Glue: coefficient flattening and padded-flat image construction.
# ---------------------------------------------------------------------------
def _flatten_coeffs(coeffs):
    # (C_out, C_in, K, K, M) -> (K*K, C_out, M*C_in) bf16, w[kk,o,m*C_in+j]
    C_out, C_in, K, _, M = coeffs.shape
    w = jnp.transpose(coeffs, (2, 3, 0, 4, 1)).reshape(K * K, C_out, M * C_in)
    return w.astype(jnp.bfloat16)


# ---------------------------------------------------------------------------
# BasicBlock forward (in_channels == out_channels, stride == 1 => identity
# shortcut, exactly like the reference's nn.Identity branch).
# ---------------------------------------------------------------------------
def basic_block_forward(x, coeffs1, coeffs2, *, num_bases, degree):
    B, C, H, W = x.shape
    Wq = W + 2                    # padded row width (padding=1 on each side)
    HWq = H * Wq
    Lq = _round_up((H + 2) * Wq + 2, 128)   # flat padded length (+slack, lane-aligned)
    knots = tuple(float(t) for t in
                  np.linspace(0.0, 1.0, num_bases + degree + 1))
    count = float(B * H * W)

    col = jnp.arange(HWq, dtype=jnp.int32) % Wq
    mask = (col < W).astype(jnp.float32).reshape(1, 1, HWq)

    def pad_flat(img):            # (B, C, H, W) -> (B, C, Lq) zero-padded, flat
        xp = jnp.pad(img, ((0, 0), (0, 0), (1, 1), (1, 1)))
        xp = xp.reshape(B, C, (H + 2) * Wq)
        return jnp.pad(xp, ((0, 0), (0, 0), (0, Lq - (H + 2) * Wq)))

    w1 = _flatten_coeffs(coeffs1)
    w2 = _flatten_coeffs(coeffs2)

    # conv1 (KAN 3x3, stride=1, padding=1) + bn1 + relu
    out1 = kan_conv(pad_flat(x), w1, knots=knots, degree=degree,
                    num_bases=num_bases, H=H, Wq=Wq)        # (B, C, H*Wq)
    h1 = _bn_call(_bn_relu_kernel, count, mask, out1)

    # conv2 (KAN 3x3, stride=1, padding=1) + bn2 + identity shortcut + relu
    h1_img = h1.reshape(B, C, H, Wq)[:, :, :, :W]
    out2 = kan_conv(pad_flat(h1_img), w2, knots=knots, degree=degree,
                    num_bases=num_bases, H=H, Wq=Wq)        # (B, C, H*Wq)
    res = jnp.pad(x, ((0, 0), (0, 0), (0, 0), (0, Wq - W))).reshape(B, C, HWq)
    y = _bn_call(_bn_add_relu_kernel, count, mask, out2, res)

    return y.reshape(B, C, H, Wq)[:, :, :, :W]


if __name__ == "__main__":
    B, C, H, W = 2, 4, 16, 16
    num_bases, degree = 6, 2

    key = jax.random.PRNGKey(0)
    kx, k1, k2 = jax.random.split(key, 3)
    # B-splines live on domain (0, 1): use uniform inputs so the bases are active.
    x = jax.random.uniform(kx, (B, C, H, W), dtype=jnp.float32)
    # Deterministic stand-ins for the per-activation torch.randn coefficients:
    # one length-`num_bases` vector per (out_ch, in_ch, ky, kx) position.
    coeffs1 = jax.random.normal(k1, (C, C, 3, 3, num_bases), dtype=jnp.float32)
    coeffs2 = jax.random.normal(k2, (C, C, 3, 3, num_bases), dtype=jnp.float32)

    fwd = jax.jit(functools.partial(basic_block_forward,
                                    num_bases=num_bases, degree=degree))
    out = fwd(x, coeffs1, coeffs2)
    jax.block_until_ready(out)
    assert out.shape == (B, C, H, W) and out.dtype == jnp.float32
    assert bool(jnp.all(jnp.isfinite(out)))
    print("KERNEL_OK")
</pallas_src>

<mosaic_0001>
module attributes {stable_mosaic.version = 11 : i64} {
  func.func @_bn_relu_kernel(%arg0: i32, %arg1: memref<1x1x288xf32, #tpu.memory_space<vmem>>, %arg2: memref<2x4x288xf32, #tpu.memory_space<vmem>>, %arg3: memref<2x4x288xf32, #tpu.memory_space<vmem>>) attributes {dimension_semantics = [#tpu.dimension_semantics<parallel>], iteration_bounds = array<i64: 1>, scalar_prefetch = 0 : i64, scratch_operands = 0 : i64, tpu.core_type = #tpu.core_type<tc>, window_params = [{pipeline_mode = #tpu.pipeline_mode<synchronous>, transform_indices = @transform_0, window_bounds = array<i64: 1, 1, 288>}, {transform_indices = @transform_1, window_bounds = array<i64: 2, 4, 288>}, {transform_indices = @transform_2, window_bounds = array<i64: 2, 4, 288>}]} {
    %c0 = arith.constant 0 : index
    %c0_0 = arith.constant 0 : index
    %c0_1 = arith.constant 0 : index
    %0 = vector.load %arg2[%c0, %c0_0, %c0_1] : memref<2x4x288xf32, #tpu.memory_space<vmem>>, vector<2x4x288xf32>
    %c0_2 = arith.constant 0 : index
    %c0_3 = arith.constant 0 : index
    %c0_4 = arith.constant 0 : index
    %1 = vector.load %arg1[%c0_2, %c0_3, %c0_4] : memref<1x1x288xf32, #tpu.memory_space<vmem>>, vector<1x1x288xf32>
    %2 = vector.broadcast %1 : vector<1x1x288xf32> to vector<2x4x288xf32>
    %3 = arith.mulf %0, %2 : vector<2x4x288xf32>
    %cst = arith.constant dense<0.000000e+00> : vector<2x4xf32>
    %4 = vector.multi_reduction <add>, %3, %cst [2] : vector<2x4x288xf32> to vector<2x4xf32>
    %5 = vector.shape_cast %4 : vector<2x4xf32> to vector<2x4x1xf32>
    %cst_5 = arith.constant dense<0.000000e+00> : vector<4x1xf32>
    %6 = vector.multi_reduction <add>, %5, %cst_5 [0] : vector<2x4x1xf32> to vector<4x1xf32>
    %7 = vector.shape_cast %6 : vector<4x1xf32> to vector<1x4x1xf32>
    %cst_6 = arith.constant 0.001953125 : f32
    %8 = vector.broadcast %cst_6 : f32 to vector<1x4x1xf32>
    %9 = arith.mulf %7, %8 : vector<1x4x1xf32>
    %10 = vector.broadcast %9 : vector<1x4x1xf32> to vector<2x4x288xf32>
    %11 = arith.subf %0, %10 : vector<2x4x288xf32>
    %12 = arith.mulf %11, %11 : vector<2x4x288xf32>
    %13 = vector.broadcast %1 : vector<1x1x288xf32> to vector<2x4x288xf32>
    %14 = arith.mulf %12, %13 : vector<2x4x288xf32>
    %cst_7 = arith.constant dense<0.000000e+00> : vector<2x4xf32>
    %15 = vector.multi_reduction <add>, %14, %cst_7 [2] : vector<2x4x288xf32> to vector<2x4xf32>
    %16 = vector.shape_cast %15 : vector<2x4xf32> to vector<2x4x1xf32>
    %cst_8 = arith.constant dense<0.000000e+00> : vector<4x1xf32>
    %17 = vector.multi_reduction <add>, %16, %cst_8 [0] : vector<2x4x1xf32> to vector<4x1xf32>
    %18 = vector.shape_cast %17 : vector<4x1xf32> to vector<1x4x1xf32>
    %cst_9 = arith.constant 0.001953125 : f32
    %19 = vector.broadcast %cst_9 : f32 to vector<1x4x1xf32>
    %20 = arith.mulf %18, %19 : vector<1x4x1xf32>
    %cst_10 = arith.constant 9.99999974E-6 : f32
    %21 = vector.broadcast %cst_10 : f32 to vector<1x4x1xf32>
    %22 = arith.addf %20, %21 : vector<1x4x1xf32>
    %23 = math.rsqrt %22 : vector<1x4x1xf32>
    %24 = vector.broadcast %23 : vector<1x4x1xf32> to vector<2x4x288xf32>
    %25 = arith.mulf %11, %24 : vector<2x4x288xf32>
    %cst_11 = arith.constant 0.000000e+00 : f32
    %26 = vector.broadcast %cst_11 : f32 to vector<2x4x288xf32>
    %27 = arith.maximumf %25, %26 : vector<2x4x288xf32>
    %c0_12 = arith.constant 0 : index
    %c0_13 = arith.constant 0 : index
    %c0_14 = arith.constant 0 : index
    %28 = vector.load %arg3[%c0_12, %c0_13, %c0_14] : memref<2x4x288xf32, #tpu.memory_space<vmem>>, vector<2x4x288xf32>
    tpu.vector_store %arg3[%c0_12, %c0_13, %c0_14], %27 {strides = array<i32>} : memref<2x4x288xf32, #tpu.memory_space<vmem>>, vector<2x4x288xf32>,
    return
  }
  func.func @transform_0(%arg0: i32) -> (i32, i32, i32) {
    %c0_i32 = arith.constant 0 : i32
    %c0_i32_0 = arith.constant 0 : i32
    %c0_i32_1 = arith.constant 0 : i32
    %c0_i32_2 = arith.constant 0 : i32
    return %c0_i32, %c0_i32_0, %c0_i32_1 : i32, i32, i32
  }
  func.func @transform_1(%arg0: i32) -> (i32, i32, i32) {
    %c0_i32 = arith.constant 0 : i32
    %c0_i32_0 = arith.constant 0 : i32
    %c0_i32_1 = arith.constant 0 : i32
    return %c0_i32, %arg0, %c0_i32_0 : i32, i32, i32
  }
  func.func @transform_2(%arg0: i32) -> (i32, i32, i32) {
    %c0_i32 = arith.constant 0 : i32
    %c0_i32_0 = arith.constant 0 : i32
    %c0_i32_1 = arith.constant 0 : i32
    return %c0_i32, %arg0, %c0_i32_0 : i32, i32, i32
  }
}

module attributes {stable_mosaic.version = 11 : i64} {
  func.func @_kan_conv_kernel(%arg0: i32, %arg1: memref<1x4x384xf32, #tpu.memory_space<vmem>>, %arg2: memref<9x4x24xbf16, #tpu.memory_space<vmem>>, %arg3: memref<1x4x288xf32, #tpu.memory_space<vmem>>, %arg4: memref<24x384xf32, #tpu.memory_space<vmem>>) attributes {dimension_semantics = [#tpu.dimension_semantics<parallel>], iteration_bounds = array<i64: 2>, scalar_prefetch = 0 : i64, scratch_operands = 1 : i64, tpu.core_type = #tpu.core_type<tc>, window_params = [{transform_indices = @transform_0, window_bounds = array<i64: 1, 4, 384>}, {pipeline_mode = #tpu.pipeline_mode<synchronous>, transform_indices = @transform_1, window_bounds = array<i64: 9, 4, 24>}, {transform_indices = @transform_2, window_bounds = array<i64: 1, 4, 288>}]} {
    %c0 = arith.constant 0 : index
    %c0_0 = arith.constant 0 : index
    %c0_1 = arith.constant 0 : index
    %0 = vector.load %arg1[%c0, %c0_0, %c0_1] : memref<1x4x384xf32, #tpu.memory_space<vmem>>, vector<1x4x384xf32>
    %1 = vector.shape_cast %0 : vector<1x4x384xf32> to vector<4x384xf32>
    %cst = arith.constant 0.000000e+00 : f32
    %2 = vector.broadcast %cst : f32 to vector<4x384xf32>
    %3 = arith.cmpf oge, %1, %2 : vector<4x384xf32>
    %cst_2 = arith.constant 1.250000e-01 : f32
    %4 = vector.broadcast %cst_2 : f32 to vector<4x384xf32>
    %5 = arith.cmpf olt, %1, %4 : vector<4x384xf32>
    %6 = arith.andi %3, %5 : vector<4x384xi1>
    %7 = arith.extui %6 : vector<4x384xi1> to vector<4x384xi32>
    %8 = arith.sitofp %7 : vector<4x384xi32> to vector<4x384xf32>
    %cst_3 = arith.constant 1.250000e-01 : f32
    %9 = vector.broadcast %cst_3 : f32 to vector<4x384xf32>
    %10 = arith.cmpf oge, %1, %9 : vector<4x384xf32>
    %cst_4 = arith.constant 2.500000e-01 : f32
    %11 = vector.broadcast %cst_4 : f32 to vector<4x384xf32>
    %12 = arith.cmpf olt, %1, %11 : vector<4x384xf32>
    %13 = arith.andi %10, %12 : vector<4x384xi1>
    %14 = arith.extui %13 : vector<4x384xi1> to vector<4x384xi32>
    %15 = arith.sitofp %14 : vector<4x384xi32> to vector<4x384xf32>
    %cst_5 = arith.constant 2.500000e-01 : f32
    %16 = vector.broadcast %cst_5 : f32 to vector<4x384xf32>
    %17 = arith.cmpf oge, %1, %16 : vector<4x384xf32>
    %cst_6 = arith.constant 3.750000e-01 : f32
    %18 = vector.broadcast %cst_6 : f32 to vector<4x384xf32>
    %19 = arith.cmpf olt, %1, %18 : vector<4x384xf32>
    %20 = arith.andi %17, %19 : vector<4x384xi1>
    %21 = arith.extui %20 : vector<4x384xi1> to vector<4x384xi32>
    %22 = arith.sitofp %21 : vector<4x384xi32> to vector<4x384xf32>
    %cst_7 = arith.constant 0.000000e+00 : f32
    %23 = vector.broadcast %cst_7 : f32 to vector<4x384xf32>
    %cst_8 = arith.constant 0.000000e+00 : f32
    %24 = vector.broadcast %cst_8 : f32 to vector<4x384xf32>
    %25 = arith.subf %1, %24 : vector<4x384xf32>
    %cst_9 = arith.constant 8.000000e+00 : f32
    %26 = vector.broadcast %cst_9 : f32 to vector<4x384xf32>
    %27 = arith.mulf %25, %26 : vector<4x384xf32>
    %28 = arith.mulf %27, %8 : vector<4x384xf32>
    %29 = arith.addf %23, %28 : vector<4x384xf32>
    %cst_10 = arith.constant 2.500000e-01 : f32
    %30 = vector.broadcast %cst_10 : f32 to vector<4x384xf32>
    %31 = arith.subf %30, %1 : vector<4x384xf32>
    %cst_11 = arith.constant 8.000000e+00 : f32
    %32 = vector.broadcast %cst_11 : f32 to vector<4x384xf32>
    %33 = arith.mulf %31, %32 : vector<4x384xf32>
    %34 = arith.mulf %33, %15 : vector<4x384xf32>
    %35 = arith.addf %29, %34 : vector<4x384xf32>
    %cst_12 = arith.constant 0.000000e+00 : f32
    %36 = vector.broadcast %cst_12 : f32 to vector<4x384xf32>
    %cst_13 = arith.constant 1.250000e-01 : f32
    %37 = vector.broadcast %cst_13 : f32 to vector<4x384xf32>
    %38 = arith.subf %1, %37 : vector<4x384xf32>
    %cst_14 = arith.constant 8.000000e+00 : f32
    %39 = vector.broadcast %cst_14 : f32 to vector<4x384xf32>
    %40 = arith.mulf %38, %39 : vector<4x384xf32>
    %41 = arith.mulf %40, %15 : vector<4x384xf32>
    %42 = arith.addf %36, %41 : vector<4x384xf32>
    %cst_15 = arith.constant 3.750000e-01 : f32
    %43 = vector.broadcast %cst_15 : f32 to vector<4x384xf32>
    %44 = arith.subf %43, %1 : vector<4x384xf32>
    %cst_16 = arith.constant 8.000000e+00 : f32
    %45 = vector.broadcast %cst_16 : f32 to vector<4x384xf32>
    %46 = arith.mulf %44, %45 : vector<4x384xf32>
    %47 = arith.mulf %46, %22 : vector<4x384xf32>
    %48 = arith.addf %42, %47 : vector<4x384xf32>
    %cst_17 = arith.constant 0.000000e+00 : f32
    %49 = vector.broadcast %cst_17 : f32 to vector<4x384xf32>
    %cst_18 = arith.constant 0.000000e+00 : f32
    %50 = vector.broadcast %cst_18 : f32 to vector<4x384xf32>
    %51 = arith.subf %1, %50 : vector<4x384xf32>
    %cst_19 = arith.constant 4.000000e+00 : f32
    %52 = vector.broadcast %cst_19 : f32 to vector<4x384xf32>
    %53 = arith.mulf %51, %52 : vector<4x384xf32>
    %54 = arith.mulf %53, %35 : vector<4x384xf32>
    %55 = arith.addf %49, %54 : vector<4x384xf32>
    %cst_20 = arith.constant 3.750000e-01 : f32
    %56 = vector.broadcast %cst_20 : f32 to vector<4x384xf32>
    %57 = arith.subf %56, %1 : vector<4x384xf32>
    %cst_21 = arith.constant 4.000000e+00 : f32
    %58 = vector.broadcast %cst_21 : f32 to vector<4x384xf32>
    %59 = arith.mulf %57, %58 : vector<4x384xf32>
    %60 = arith.mulf %59, %48 : vector<4x384xf32>
    %61 = arith.addf %55, %60 : vector<4x384xf32>
    %c0_22 = arith.constant 0 : index
    %c0_23 = arith.constant 0 : index
    %62 = vector.load %arg4[%c0_22, %c0_23] : memref<24x384xf32, #tpu.memory_space<vmem>>, vector<4x384xf32>
    tpu.vector_store %arg4[%c0_22, %c0_23], %61 {strides = array<i32>} : memref<24x384xf32, #tpu.memory_space<vmem>>, vector<4x384xf32>,
    %cst_24 = arith.constant 1.250000e-01 : f32
    %63 = vector.broadcast %cst_24 : f32 to vector<4x384xf32>
    %64 = arith.cmpf oge, %1, %63 : vector<4x384xf32>
    %cst_25 = arith.constant 2.500000e-01 : f32
    %65 = vector.broadcast %cst_25 : f32 to vector<4x384xf32>
    %66 = arith.cmpf olt, %1, %65 : vector<4x384xf32>
    %67 = arith.andi %64, %66 : vector<4x384xi1>
    %68 = arith.extui %67 : vector<4x384xi1> to vector<4x384xi32>
    %69 = arith.sitofp %68 : vector<4x384xi32> to vector<4x384xf32>
    %cst_26 = arith.constant 2.500000e-01 : f32
    %70 = vector.broadcast %cst_26 : f32 to vector<4x384xf32>
    %71 = arith.cmpf oge, %1, %70 : vector<4x384xf32>
    %cst_27 = arith.constant 3.750000e-01 : f32
    %72 = vector.broadcast %cst_27 : f32 to vector<4x384xf32>
    %73 = arith.cmpf olt, %1, %72 : vector<4x384xf32>
    %74 = arith.andi %71, %73 : vector<4x384xi1>
    %75 = arith.extui %74 : vector<4x384xi1> to vector<4x384xi32>
    %76 = arith.sitofp %75 : vector<4x384xi32> to vector<4x384xf32>
    %cst_28 = arith.constant 3.750000e-01 : f32
    %77 = vector.broadcast %cst_28 : f32 to vector<4x384xf32>
    %78 = arith.cmpf oge, %1, %77 : vector<4x384xf32>
    %cst_29 = arith.constant 5.000000e-01 : f32
    %79 = vector.broadcast %cst_29 : f32 to vector<4x384xf32>
    %80 = arith.cmpf olt, %1, %79 : vector<4x384xf32>
    %81 = arith.andi %78, %80 : vector<4x384xi1>
    %82 = arith.extui %81 : vector<4x384xi1> to vector<4x384xi32>
    %83 = arith.sitofp %82 : vector<4x384xi32> to vector<4x384xf32>
    %cst_30 = arith.constant 0.000000e+00 : f32
    %84 = vector.broadcast %cst_30 : f32 to vector<4x384xf32>
    %cst_31 = arith.constant 1.250000e-01 : f32
    %85 = vector.broadcast %cst_31 : f32 to vector<4x384xf32>
    %86 = arith.subf %1, %85 : vector<4x384xf32>
    %cst_32 = arith.constant 8.000000e+00 : f32
    %87 = vector.broadcast %cst_32 : f32 to vector<4x384xf32>
    %88 = arith.mulf %86, %87 : vector<4x384xf32>
    %89 = arith.mulf %88, %69 : vector<4x384xf32>
    %90 = arith.addf %84, %89 : vector<4x384xf32>
    %cst_33 = arith.constant 3.750000e-01 : f32
    %91 = vector.broadcast %cst_33 : f32 to vector<4x384xf32>
    %92 = arith.subf %91, %1 : vector<4x384xf32>
    %cst_34 = arith.constant 8.000000e+00 : f32
    %93 = vector.broadcast %cst_34 : f32 to vector<4x384xf32>
    %94 = arith.mulf %92, %93 : vector<4x384xf32>
    %95 = arith.mulf %94, %76 : vector<4x384xf32>
    %96 = arith.addf %90, %95 : vector<4x384xf32>
    %cst_35 = arith.constant 0.000000e+00 : f32
    %97 = vector.broadcast %cst_35 : f32 to vector<4x384xf32>
    %cst_36 = arith.constant 2.500000e-01 : f32
    %98 = vector.broadcast %cst_36 : f32 to vector<4x384xf32>
    %99 = arith.subf %1, %98 : vector<4x384xf32>
    %cst_37 = arith.constant 8.000000e+00 : f32
    %100 = vector.broadcast %cst_37 : f32 to vector<4x384xf32>
    %101 = arith.mulf %99, %100 : vector<4x384xf32>
    %102 = arith.mulf %101, %76 : vector<4x384xf32>
    %103 = arith.addf %97, %102 : vector<4x384xf32>
    %cst_38 = arith.constant 5.000000e-01 : f32
    %104 = vector.broadcast %cst_38 : f32 to vector<4x384xf32>
    %105 = arith.subf %104, %1 : vector<4x384xf32>
    %cst_39 = arith.constant 8.000000e+00 : f32
    %106 = vector.broadcast %cst_39 : f32 to vector<4x384xf32>
    %107 = arith.mulf %105, %106 : vector<4x384xf32>
    %108 = arith.mulf %107, %83 : vector<4x384xf32>
    %109 = arith.addf %103, %108 : vector<4x384xf32>
    %cst_40 = arith.constant 0.000000e+00 : f32
    %110 = vector.broadcast %cst_40 : f32 to vector<4x384xf32>
    %cst_41 = arith.constant 1.250000e-01 : f32
    %111 = vector.broadcast %cst_41 : f32 to vector<4x384xf32>
    %112 = arith.subf %1, %111 : vector<4x384xf32>
    %cst_42 = arith.constant 4.000000e+00 : f32
    %113 = vector.broadcast %cst_42 : f32 to vector<4x384xf32>
    %114 = arith.mulf %112, %113 : vector<4x384xf32>
    %115 = arith.mulf %114, %96 : vector<4x384xf32>
    %116 = arith.addf %110, %115 : vector<4x384xf32>
    %cst_43 = arith.constant 5.000000e-01 : f32
    %117 = vector.broadcast %cst_43 : f32 to vector<4x384xf32>
    %118 = arith.subf %117, %1 : vector<4x384xf32>
    %cst_44 = arith.constant 4.000000e+00 : f32
    %119 = vector.broadcast %cst_44 : f32 to vector<4x384xf32>
    %120 = arith.mulf %118, %119 : vector<4x384xf32>
    %121 = arith.mulf %120, %109 : vector<4x384xf32>
    %122 = arith.addf %116, %121 : vector<4x384xf32>
    %c4 = arith.constant 4 : index
    %c0_45 = arith.constant 0 : index
    %123 = vector.load %arg4[%c4, %c0_45] : memref<24x384xf32, #tpu.memory_space<vmem>>, vector<4x384xf32>
    tpu.vector_store %arg4[%c4, %c0_45], %122 {strides = array<i32>} : memref<24x384xf32, #tpu.memory_space<vmem>>, vector<4x384xf32>,
    %cst_46 = arith.constant 2.500000e-01 : f32
    %124 = vector.broadcast %cst_46 : f32 to vector<4x384xf32>
    %125 = arith.cmpf oge, %1, %124 : vector<4x384xf32>
    %cst_47 = arith.constant 3.750000e-01 : f32
    %126 = vector.broadcast %cst_47 : f32 to vector<4x384xf32>
    %127 = arith.cmpf olt, %1, %126 : vector<4x384xf32>
    %128 = arith.andi %125, %127 : vector<4x384xi1>
    %129 = arith.extui %128 : vector<4x384xi1> to vector<4x384xi32>
    %130 = arith.sitofp %129 : vector<4x384xi32> to vector<4x384xf32>
    %cst_48 = arith.constant 3.750000e-01 : f32
    %131 = vector.broadcast %cst_48 : f32 to vector<4x384xf32>
    %132 = arith.cmpf oge, %1, %131 : vector<4x384xf32>
    %cst_49 = arith.constant 5.000000e-01 : f32
    %133 = vector.broadcast %cst_49 : f32 to vector<4x384xf32>
    %134 = arith.cmpf olt, %1, %133 : vector<4x384xf32>
    %135 = arith.andi %132, %134 : vector<4x384xi1>
    %136 = arith.extui %135 : vector<4x384xi1> to vector<4x384xi32>
    %137 = arith.sitofp %136 : vector<4x384xi32> to vector<4x384xf32>
    %cst_50 = arith.constant 5.000000e-01 : f32
    %138 = vector.broadcast %cst_50 : f32 to vector<4x384xf32>
    %139 = arith.cmpf oge, %1, %138 : vector<4x384xf32>
    %cst_51 = arith.constant 6.250000e-01 : f32
    %140 = vector.broadcast %cst_51 : f32 to vector<4x384xf32>
    %141 = arith.cmpf olt, %1, %140 : vector<4x384xf32>
    %142 = arith.andi %139, %141 : vector<4x384xi1>
    %143 = arith.extui %142 : vector<4x384xi1> to vector<4x384xi32>
    %144 = arith.sitofp %143 : vector<4x384xi32> to vector<4x384xf32>
    %cst_52 = arith.constant 0.000000e+00 : f32
    %145 = vector.broadcast %cst_52 : f32 to vector<4x384xf32>
    %cst_53 = arith.constant 2.500000e-01 : f32
    %146 = vector.broadcast %cst_53 : f32 to vector<4x384xf32>
    %147 = arith.subf %1, %146 : vector<4x384xf32>
    %cst_54 = arith.constant 8.000000e+00 : f32
    %148 = vector.broadcast %cst_54 : f32 to vector<4x384xf32>
    %149 = arith.mulf %147, %148 : vector<4x384xf32>
    %150 = arith.mulf %149, %130 : vector<4x384xf32>
    %151 = arith.addf %145, %150 : vector<4x384xf32>
    %cst_55 = arith.constant 5.000000e-01 : f32
    %152 = vector.broadcast %cst_55 : f32 to vector<4x384xf32>
    %153 = arith.subf %152, %1 : vector<4x384xf32>
    %cst_56 = arith.constant 8.000000e+00 : f32
    %154 = vector.broadcast %cst_56 : f32 to vector<4x384xf32>
    %155 = arith.mulf %153, %154 : vector<4x384xf32>
    %156 = arith.mulf %155, %137 : vector<4x384xf32>
    %157 = arith.addf %151, %156 : vector<4x384xf32>
    %cst_57 = arith.constant 0.000000e+00 : f32
    %158 = vector.broadcast %cst_57 : f32 to vector<4x384xf32>
    %cst_58 = arith.constant 3.750000e-01 : f32
    %159 = vector.broadcast %cst_58 : f32 to vector<4x384xf32>
    %160 = arith.subf %1, %159 : vector<4x384xf32>
    %cst_59 = arith.constant 8.000000e+00 : f32
    %161 = vector.broadcast %cst_59 : f32 to vector<4x384xf32>
    %162 = arith.mulf %160, %161 : vector<4x384xf32>
    %163 = arith.mulf %162, %137 : vector<4x384xf32>
    %164 = arith.addf %158, %163 : vector<4x384xf32>
    %cst_60 = arith.constant 6.250000e-01 : f32
    %165 = vector.broadcast %cst_60 : f32 to vector<4x384xf32>
    %166 = arith.subf %165, %1 : vector<4x384xf32>
    %cst_61 = arith.constant 8.000000e+00 : f32
    %167 = vector.broadcast %cst_61 : f32 to vector<4x384xf32>
    %168 = arith.mulf %166, %167 : vector<4x384xf32>
    %169 = arith.mulf %168, %144 : vector<4x384xf32>
    %170 = arith.addf %164, %169 : vector<4x384xf32>
    %cst_62 = arith.constant 0.000000e+00 : f32
    %171 = vector.broadcast %cst_62 : f32 to vector<4x384xf32>
    %cst_63 = arith.constant 2.500000e-01 : f32
    %172 = vector.broadcast %cst_63 : f32 to vector<4x384xf32>
    %173 = arith.subf %1, %172 : vector<4x384xf32>
    %cst_64 = arith.constant 4.000000e+00 : f32
    %174 = vector.broadcast %cst_64 : f32 to vector<4x384xf32>
    %175 = arith.mulf %173, %174 : vector<4x384xf32>
    %176 = arith.mulf %175, %157 : vector<4x384xf32>
    %177 = arith.addf %171, %176 : vector<4x384xf32>
    %cst_65 = arith.constant 6.250000e-01 : f32
    %178 = vector.broadcast %cst_65 : f32 to vector<4x384xf32>
    %179 = arith.subf %178, %1 : vector<4x384xf32>
    %cst_66 = arith.constant 4.000000e+00 : f32
    %180 = vector.broadcast %cst_66 : f32 to vector<4x384xf32>
    %181 = arith.mulf %179, %180 : vector<4x384xf32>
    %182 = arith.mulf %181, %170 : vector<4x384xf32>
    %183 = arith.addf %177, %182 : vector<4x384xf32>
    %c8 = arith.constant 8 : index
    %c0_67 = arith.constant 0 : index
    %184 = vector.load %arg4[%c8, %c0_67] : memref<24x384xf32, #tpu.memory_space<vmem>>, vector<4x384xf32>
    tpu.vector_store %arg4[%c8, %c0_67], %183 {strides = array<i32>} : memref<24x384xf32, #tpu.memory_space<vmem>>, vector<4x384xf32>,
    %cst_68 = arith.constant 3.750000e-01 : f32
    %185 = vector.broadcast %cst_68 : f32 to vector<4x384xf32>
    %186 = arith.cmpf oge, %1, %185 : vector<4x384xf32>
    %cst_69 = arith.constant 5.000000e-01 : f32
    %187 = vector.broadcast %cst_69 : f32 to vector<4x384xf32>
    %188 = arith.cmpf olt, %1, %187 : vector<4x384xf32>
    %189 = arith.andi %186, %188 : vector<4x384xi1>
    %190 = arith.extui %189 : vector<4x384xi1> to vector<4x384xi32>
    %191 = arith.sitofp %190 : vector<4x384xi32> to vector<4x384xf32>
    %cst_70 = arith.constant 5.000000e-01 : f32
    %192 = vector.broadcast %cst_70 : f32 to vector<4x384xf32>
    %193 = arith.cmpf oge, %1, %192 : vector<4x384xf32>
    %cst_71 = arith.constant 6.250000e-01 : f32
    %194 = vector.broadcast %cst_71 : f32 to vector<4x384xf32>
    %195 = arith.cmpf olt, %1, %194 : vector<4x384xf32>
    %196 = arith.andi %193, %195 : vector<4x384xi1>
    %197 = arith.extui %196 : vector<4x384xi1> to vector<4x384xi32>
    %198 = arith.sitofp %197 : vector<4x384xi32> to vector<4x384xf32>
    %cst_72 = arith.constant 6.250000e-01 : f32
    %199 = vector.broadcast %cst_72 : f32 to vector<4x384xf32>
    %200 = arith.cmpf oge, %1, %199 : vector<4x384xf32>
    %cst_73 = arith.constant 7.500000e-01 : f32
    %201 = vector.broadcast %cst_73 : f32 to vector<4x384xf32>
    %202 = arith.cmpf olt, %1, %201 : vector<4x384xf32>
    %203 = arith.andi %200, %202 : vector<4x384xi1>
    %204 = arith.extui %203 : vector<4x384xi1> to vector<4x384xi32>
    %205 = arith.sitofp %204 : vector<4x384xi32> to vector<4x384xf32>
    %cst_74 = arith.constant 0.000000e+00 : f32
    %206 = vector.broadcast %cst_74 : f32 to vector<4x384xf32>
    %cst_75 = arith.constant 3.750000e-01 : f32
    %207 = vector.broadcast %cst_75 : f32 to vector<4x384xf32>
    %208 = arith.subf %1, %207 : vector<4x384xf32>
    %cst_76 = arith.constant 8.000000e+00 : f32
    %209 = vector.broadcast %cst_76 : f32 to vector<4x384xf32>
    %210 = arith.mulf %208, %209 : vector<4x384xf32>
    %211 = arith.mulf %210, %191 : vector<4x384xf32>
    %212 = arith.addf %206, %211 : vector<4x384xf32>
    %cst_77 = arith.constant 6.250000e-01 : f32
    %213 = vector.broadcast %cst_77 : f32 to vector<4x384xf32>
    %214 = arith.subf %213, %1 : vector<4x384xf32>
    %cst_78 = arith.constant 8.000000e+00 : f32
    %215 = vector.broadcast %cst_78 : f32 to vector<4x384xf32>
    %216 = arith.mulf %214, %215 : vector<4x384xf32>
    %217 = arith.mulf %216, %198 : vector<4x384xf32>
    %218 = arith.addf %212, %217 : vector<4x384xf32>
    %cst_79 = arith.constant 0.000000e+00 : f32
    %219 = vector.broadcast %cst_79 : f32 to vector<4x384xf32>
    %cst_80 = arith.constant 5.000000e-01 : f32
    %220 = vector.broadcast %cst_80 : f32 to vector<4x384xf32>
    %221 = arith.subf %1, %220 : vector<4x384xf32>
    %cst_81 = arith.constant 8.000000e+00 : f32
    %222 = vector.broadcast %cst_81 : f32 to vector<4x384xf32>
    %223 = arith.mulf %221, %222 : vector<4x384xf32>
    %224 = arith.mulf %223, %198 : vector<4x384xf32>
    %225 = arith.addf %219, %224 : vector<4x384xf32>
    %cst_82 = arith.constant 7.500000e-01 : f32
    %226 = vector.broadcast %cst_82 : f32 to vector<4x384xf32>
    %227 = arith.subf %226, %1 : vector<4x384xf32>
    %cst_83 = arith.constant 8.000000e+00 : f32
    %228 = vector.broadcast %cst_83 : f32 to vector<4x384xf32>
    %229 = arith.mulf %227, %228 : vector<4x384xf32>
    %230 = arith.mulf %229, %205 : vector<4x384xf32>
    %231 = arith.addf %225, %230 : vector<4x384xf32>
    %cst_84 = arith.constant 0.000000e+00 : f32
    %232 = vector.broadcast %cst_84 : f32 to vector<4x384xf32>
    %cst_85 = arith.constant 3.750000e-01 : f32
    %233 = vector.broadcast %cst_85 : f32 to vector<4x384xf32>
    %234 = arith.subf %1, %233 : vector<4x384xf32>
    %cst_86 = arith.constant 4.000000e+00 : f32
    %235 = vector.broadcast %cst_86 : f32 to vector<4x384xf32>
    %236 = arith.mulf %234, %235 : vector<4x384xf32>
    %237 = arith.mulf %236, %218 : vector<4x384xf32>
    %238 = arith.addf %232, %237 : vector<4x384xf32>
    %cst_87 = arith.constant 7.500000e-01 : f32
    %239 = vector.broadcast %cst_87 : f32 to vector<4x384xf32>
    %240 = arith.subf %239, %1 : vector<4x384xf32>
    %cst_88 = arith.constant 4.000000e+00 : f32
    %241 = vector.broadcast %cst_88 : f32 to vector<4x384xf32>
    %242 = arith.mulf %240, %241 : vector<4x384xf32>
    %243 = arith.mulf %242, %231 : vector<4x384xf32>
    %244 = arith.addf %238, %243 : vector<4x384xf32>
    %c12 = arith.constant 12 : index
    %c0_89 = arith.constant 0 : index
    %245 = vector.load %arg4[%c12, %c0_89] : memref<24x384xf32, #tpu.memory_space<vmem>>, vector<4x384xf32>
    tpu.vector_store %arg4[%c12, %c0_89], %244 {strides = array<i32>} : memref<24x384xf32, #tpu.memory_space<vmem>>, vector<4x384xf32>,
    %cst_90 = arith.constant 5.000000e-01 : f32
    %246 = vector.broadcast %cst_90 : f32 to vector<4x384xf32>
    %247 = arith.cmpf oge, %1, %246 : vector<4x384xf32>
    %cst_91 = arith.constant 6.250000e-01 : f32
    %248 = vector.broadcast %cst_91 : f32 to vector<4x384xf32>
    %249 = arith.cmpf olt, %1, %248 : vector<4x384xf32>
    %250 = arith.andi %247, %249 : vector<4x384xi1>
    %251 = arith.extui %250 : vector<4x384xi1> to vector<4x384xi32>
    %252 = arith.sitofp %251 : vector<4x384xi32> to vector<4x384xf32>
    %cst_92 = arith.constant 6.250000e-01 : f32
    %253 = vector.broadcast %cst_92 : f32 to vector<4x384xf32>
    %254 = arith.cmpf oge, %1, %253 : vector<4x384xf32>
    %cst_93 = arith.constant 7.500000e-01 : f32
    %255 = vector.broadcast %cst_93 : f32 to vector<4x384xf32>
    %256 = arith.cmpf olt, %1, %255 : vector<4x384xf32>
    %257 = arith.andi %254, %256 : vector<4x384xi1>
    %258 = arith.extui %257 : vector<4x384xi1> to vector<4x384xi32>
    %259 = arith.sitofp %258 : vector<4x384xi32> to vector<4x384xf32>
    %cst_94 = arith.constant 7.500000e-01 : f32
    %260 = vector.broadcast %cst_94 : f32 to vector<4x384xf32>
    %261 = arith.cmpf oge, %1, %260 : vector<4x384xf32>
    %cst_95 = arith.constant 8.750000e-01 : f32
    %262 = vector.broadcast %cst_95 : f32 to vector<4x384xf32>
    %263 = arith.cmpf olt, %1, %262 : vector<4x384xf32>
    %264 = arith.andi %261, %263 : vector<4x384xi1>
    %265 = arith.extui %264 : vector<4x384xi1> to vector<4x384xi32>
    %266 = arith.sitofp %265 : vector<4x384xi32> to vector<4x384xf32>
    %cst_96 = arith.constant 0.000000e+00 : f32
    %267 = vector.broadcast %cst_96 : f32 to vector<4x384xf32>
    %cst_97 = arith.constant 5.000000e-01 : f32
    %268 = vector.broadcast %cst_97 : f32 to vector<4x384xf32>
    %269 = arith.subf %1, %268 : vector<4x384xf32>
    %cst_98 = arith.constant 8.000000e+00 : f32
    %270 = vector.broadcast %cst_98 : f32 to vector<4x384xf32>
    %271 = arith.mulf %269, %270 : vector<4x384xf32>
    %272 = arith.mulf %271, %252 : vector<4x384xf32>
    %273 = arith.addf %267, %272 : vector<4x384xf32>
    %cst_99 = arith.constant 7.500000e-01 : f32
    %274 = vector.broadcast %cst_99 : f32 to vector<4x384xf32>
    %275 = arith.subf %274, %1 : vector<4x384xf32>
    %cst_100 = arith.constant 8.000000e+00 : f32
    %276 = vector.broadcast %cst_100 : f32 to vector<4x384xf32>
    %277 = arith.mulf %275, %276 : vector<4x384xf32>
    %278 = arith.mulf %277, %259 : vector<4x384xf32>
    %279 = arith.addf %273, %278 : vector<4x384xf32>
    %cst_101 = arith.constant 0.000000e+00 : f32
    %280 = vector.broadcast %cst_101 : f32 to vector<4x384xf32>
    %cst_102 = arith.constant 6.250000e-01 : f32
    %281 = vector.broadcast %cst_102 : f32 to vector<4x384xf32>
    %282 = arith.subf %1, %281 : vector<4x384xf32>
    %cst_103 = arith.constant 8.000000e+00 : f32
    %283 = vector.broadcast %cst_103 : f32 to vector<4x384xf32>
    %284 = arith.mulf %282, %283 : vector<4x384xf32>
    %285 = arith.mulf %284, %259 : vector<4x384xf32>
    %286 = arith.addf %280, %285 : vector<4x384xf32>
    %cst_104 = arith.constant 8.750000e-01 : f32
    %287 = vector.broadcast %cst_104 : f32 to vector<4x384xf32>
    %288 = arith.subf %287, %1 : vector<4x384xf32>
    %cst_105 = arith.constant 8.000000e+00 : f32
    %289 = vector.broadcast %cst_105 : f32 to vector<4x384xf32>
    %290 = arith.mulf %288, %289 : vector<4x384xf32>
    %291 = arith.mulf %290, %266 : vector<4x384xf32>
    %292 = arith.addf %286, %291 : vector<4x384xf32>
    %cst_106 = arith.constant 0.000000e+00 : f32
    %293 = vector.broadcast %cst_106 : f32 to vector<4x384xf32>
    %cst_107 = arith.constant 5.000000e-01 : f32
    %294 = vector.broadcast %cst_107 : f32 to vector<4x384xf32>
    %295 = arith.subf %1, %294 : vector<4x384xf32>
    %cst_108 = arith.constant 4.000000e+00 : f32
    %296 = vector.broadcast %cst_108 : f32 to vector<4x384xf32>
    %297 = arith.mulf %295, %296 : vector<4x384xf32>
    %298 = arith.mulf %297, %279 : vector<4x384xf32>
    %299 = arith.addf %293, %298 : vector<4x384xf32>
    %cst_109 = arith.constant 8.750000e-01 : f32
    %300 = vector.broadcast %cst_109 : f32 to vector<4x384xf32>
    %301 = arith.subf %300, %1 : vector<4x384xf32>
    %cst_110 = arith.constant 4.000000e+00 : f32
    %302 = vector.broadcast %cst_110 : f32 to vector<4x384xf32>
    %303 = arith.mulf %301, %302 : vector<4x384xf32>
    %304 = arith.mulf %303, %292 : vector<4x384xf32>
    %305 = arith.addf %299, %304 : vector<4x384xf32>
    %c16 = arith.constant 16 : index
    %c0_111 = arith.constant 0 : index
    %306 = vector.load %arg4[%c16, %c0_111] : memref<24x384xf32, #tpu.memory_space<vmem>>, vector<4x384xf32>
    tpu.vector_store %arg4[%c16, %c0_111], %305 {strides = array<i32>} : memref<24x384xf32, #tpu.memory_space<vmem>>, vector<4x384xf32>,
    %cst_112 = arith.constant 6.250000e-01 : f32
    %307 = vector.broadcast %cst_112 : f32 to vector<4x384xf32>
    %308 = arith.cmpf oge, %1, %307 : vector<4x384xf32>
    %cst_113 = arith.constant 7.500000e-01 : f32
    %309 = vector.broadcast %cst_113 : f32 to vector<4x384xf32>
    %310 = arith.cmpf olt, %1, %309 : vector<4x384xf32>
    %311 = arith.andi %308, %310 : vector<4x384xi1>
    %312 = arith.extui %311 : vector<4x384xi1> to vector<4x384xi32>
    %313 = arith.sitofp %312 : vector<4x384xi32> to vector<4x384xf32>
    %cst_114 = arith.constant 7.500000e-01 : f32
    %314 = vector.broadcast %cst_114 : f32 to vector<4x384xf32>
    %315 = arith.cmpf oge, %1, %314 : vector<4x384xf32>
    %cst_115 = arith.constant 8.750000e-01 : f32
    %316 = vector.broadcast %cst_115 : f32 to vector<4x384xf32>
    %317 = arith.cmpf olt, %1, %316 : vector<4x384xf32>
    %318 = arith.andi %315, %317 : vector<4x384xi1>
    %319 = arith.extui %318 : vector<4x384xi1> to vector<4x384xi32>
    %320 = arith.sitofp %319 : vector<4x384xi32> to vector<4x384xf32>
    %cst_116 = arith.constant 8.750000e-01 : f32
    %321 = vector.broadcast %cst_116 : f32 to vector<4x384xf32>
    %322 = arith.cmpf oge, %1, %321 : vector<4x384xf32>
    %cst_117 = arith.constant 1.000000e+00 : f32
    %323 = vector.broadcast %cst_117 : f32 to vector<4x384xf32>
    %324 = arith.cmpf olt, %1, %323 : vector<4x384xf32>
    %325 = arith.andi %322, %324 : vector<4x384xi1>
    %326 = arith.extui %325 : vector<4x384xi1> to vector<4x384xi32>
    %327 = arith.sitofp %326 : vector<4x384xi32> to vector<4x384xf32>
    %cst_118 = arith.constant 0.000000e+00 : f32
    %328 = vector.broadcast %cst_118 : f32 to vector<4x384xf32>
    %cst_119 = arith.constant 6.250000e-01 : f32
    %329 = vector.broadcast %cst_119 : f32 to vector<4x384xf32>
    %330 = arith.subf %1, %329 : vector<4x384xf32>
    %cst_120 = arith.constant 8.000000e+00 : f32
    %331 = vector.broadcast %cst_120 : f32 to vector<4x384xf32>
    %332 = arith.mulf %330, %331 : vector<4x384xf32>
    %333 = arith.mulf %332, %313 : vector<4x384xf32>
    %334 = arith.addf %328, %333 : vector<4x384xf32>
    %cst_121 = arith.constant 8.750000e-01 : f32
    %335 = vector.broadcast %cst_121 : f32 to vector<4x384xf32>
    %336 = arith.subf %335, %1 : vector<4x384xf32>
    %cst_122 = arith.constant 8.000000e+00 : f32
    %337 = vector.broadcast %cst_122 : f32 to vector<4x384xf32>
    %338 = arith.mulf %336, %337 : vector<4x384xf32>
    %339 = arith.mulf %338, %320 : vector<4x384xf32>
    %340 = arith.addf %334, %339 : vector<4x384xf32>
    %cst_123 = arith.constant 0.000000e+00 : f32
    %341 = vector.broadcast %cst_123 : f32 to vector<4x384xf32>
    %cst_124 = arith.constant 7.500000e-01 : f32
    %342 = vector.broadcast %cst_124 : f32 to vector<4x384xf32>
    %343 = arith.subf %1, %342 : vector<4x384xf32>
    %cst_125 = arith.constant 8.000000e+00 : f32
    %344 = vector.broadcast %cst_125 : f32 to vector<4x384xf32>
    %345 = arith.mulf %343, %344 : vector<4x384xf32>
    %346 = arith.mulf %345, %320 : vector<4x384xf32>
    %347 = arith.addf %341, %346 : vector<4x384xf32>
    %cst_126 = arith.constant 1.000000e+00 : f32
    %348 = vector.broadcast %cst_126 : f32 to vector<4x384xf32>
    %349 = arith.subf %348, %1 : vector<4x384xf32>
    %cst_127 = arith.constant 8.000000e+00 : f32
    %350 = vector.broadcast %cst_127 : f32 to vector<4x384xf32>
    %351 = arith.mulf %349, %350 : vector<4x384xf32>
    %352 = arith.mulf %351, %327 : vector<4x384xf32>
    %353 = arith.addf %347, %352 : vector<4x384xf32>
    %cst_128 = arith.constant 0.000000e+00 : f32
    %354 = vector.broadcast %cst_128 : f32 to vector<4x384xf32>
    %cst_129 = arith.constant 6.250000e-01 : f32
    %355 = vector.broadcast %cst_129 : f32 to vector<4x384xf32>
    %356 = arith.subf %1, %355 : vector<4x384xf32>
    %cst_130 = arith.constant 4.000000e+00 : f32
    %357 = vector.broadcast %cst_130 : f32 to vector<4x384xf32>
    %358 = arith.mulf %356, %357 : vector<4x384xf32>
    %359 = arith.mulf %358, %340 : vector<4x384xf32>
    %360 = arith.addf %354, %359 : vector<4x384xf32>
    %cst_131 = arith.constant 1.000000e+00 : f32
    %361 = vector.broadcast %cst_131 : f32 to vector<4x384xf32>
    %362 = arith.subf %361, %1 : vector<4x384xf32>
    %cst_132 = arith.constant 4.000000e+00 : f32
    %363 = vector.broadcast %cst_132 : f32 to vector<4x384xf32>
    %364 = arith.mulf %362, %363 : vector<4x384xf32>
    %365 = arith.mulf %364, %353 : vector<4x384xf32>
    %366 = arith.addf %360, %365 : vector<4x384xf32>
    %c20 = arith.constant 20 : index
    %c0_133 = arith.constant 0 : index
    %367 = vector.load %arg4[%c20, %c0_133] : memref<24x384xf32, #tpu.memory_space<vmem>>, vector<4x384xf32>
    tpu.vector_store %arg4[%c20, %c0_133], %366 {strides = array<i32>} : memref<24x384xf32, #tpu.memory_space<vmem>>, vector<4x384xf32>,
    %cst_134 = arith.constant 0.000000e+00 : f32
    %368 = vector.broadcast %cst_134 : f32 to vector<4x288xf32>
    %c0_135 = arith.constant 0 : index
    %c0_136 = arith.constant 0 : index
    %369 = vector.load %arg4[%c0_135, %c0_136] : memref<24x384xf32, #tpu.memory_space<vmem>>, vector<24x288xf32>
    %370 = arith.truncf %369 : vector<24x288xf32> to vector<24x288xbf16>
    %c0_137 = arith.constant 0 : index
    %c0_138 = arith.constant 0 : index
    %c0_139 = arith.constant 0 : index
    %371 = vector.load %arg2[%c0_137, %c0_138, %c0_139] : memref<9x4x24xbf16, #tpu.memory_space<vmem>>, vector<1x4x24xbf16>
    %372 = vector.shape_cast %371 : vector<1x4x24xbf16> to vector<4x24xbf16>
    %cst_140 = arith.constant dense<0.000000e+00> : vector<4x288xf32>
    %373 = tpu.matmul %372, %370, %cst_140 {dimension_numbers = #tpu.dot_dimension_numbers<[1], [0], [0], [1], [0, 0, 1, 1], [], []>} : vector<4x24xbf16>, vector<24x288xbf16>, vector<4x288xf32> -> vector<4x288xf32>
    %374 = arith.addf %368, %373 : vector<4x288xf32>
    %c0_141 = arith.constant 0 : index
    %c1 = arith.constant 1 : index
    %375 = vector.load %arg4[%c0_141, %c1] : memref<24x384xf32, #tpu.memory_space<vmem>>, vector<24x288xf32>
    %376 = arith.truncf %375 : vector<24x288xf32> to vector<24x288xbf16>
    %c1_142 = arith.constant 1 : index
    %c0_143 = arith.constant 0 : index
    %c0_144 = arith.constant 0 : index
    %377 = vector.load %arg2[%c1_142, %c0_143, %c0_144] : memref<9x4x24xbf16, #tpu.memory_space<vmem>>, vector<1x4x24xbf16>
    %378 = vector.shape_cast %377 : vector<1x4x24xbf16> to vector<4x24xbf16>
    %cst_145 = arith.constant dense<0.000000e+00> : vector<4x288xf32>
    %379 = tpu.matmul %378, %376, %cst_145 {dimension_numbers = #tpu.dot_dimension_numbers<[1], [0], [0], [1], [0, 0, 1, 1], [], []>} : vector<4x24xbf16>, vector<24x288xbf16>, vector<4x288xf32> -> vector<4x288xf32>
    %380 = arith.addf %374, %379 : vector<4x288xf32>
    %c0_146 = arith.constant 0 : index
    %c2 = arith.constant 2 : index
    %381 = vector.load %arg4[%c0_146, %c2] : memref<24x384xf32, #tpu.memory_space<vmem>>, vector<24x288xf32>
    %382 = arith.truncf %381 : vector<24x288xf32> to vector<24x288xbf16>
    %c2_147 = arith.constant 2 : index
    %c0_148 = arith.constant 0 : index
    %c0_149 = arith.constant 0 : index
    %383 = vector.load %arg2[%c2_147, %c0_148, %c0_149] : memref<9x4x24xbf16, #tpu.memory_space<vmem>>, vector<1x4x24xbf16>
    %384 = vector.shape_cast %383 : vector<1x4x24xbf16> to vector<4x24xbf16>
    %cst_150 = arith.constant dense<0.000000e+00> : vector<4x288xf32>
    %385 = tpu.matmul %384, %382, %cst_150 {dimension_numbers = #tpu.dot_dimension_numbers<[1], [0], [0], [1], [0, 0, 1, 1], [], []>} : vector<4x24xbf16>, vector<24x288xbf16>, vector<4x288xf32> -> vector<4x288xf32>
    %386 = arith.addf %380, %385 : vector<4x288xf32>
    %c0_151 = arith.constant 0 : index
    %c18 = arith.constant 18 : index
    %387 = vector.load %arg4[%c0_151, %c18] : memref<24x384xf32, #tpu.memory_space<vmem>>, vector<24x288xf32>
    %388 = arith.truncf %387 : vector<24x288xf32> to vector<24x288xbf16>
    %c3 = arith.constant 3 : index
    %c0_152 = arith.constant 0 : index
    %c0_153 = arith.constant 0 : index
    %389 = vector.load %arg2[%c3, %c0_152, %c0_153] : memref<9x4x24xbf16, #tpu.memory_space<vmem>>, vector<1x4x24xbf16>
    %390 = vector.shape_cast %389 : vector<1x4x24xbf16> to vector<4x24xbf16>
    %cst_154 = arith.constant dense<0.000000e+00> : vector<4x288xf32>
    %391 = tpu.matmul %390, %388, %cst_154 {dimension_numbers = #tpu.dot_dimension_numbers<[1], [0], [0], [1], [0, 0, 1, 1], [], []>} : vector<4x24xbf16>, vector<24x288xbf16>, vector<4x288xf32> -> vector<4x288xf32>
    %392 = arith.addf %386, %391 : vector<4x288xf32>
    %c0_155 = arith.constant 0 : index
    %c19 = arith.constant 19 : index
    %393 = vector.load %arg4[%c0_155, %c19] : memref<24x384xf32, #tpu.memory_space<vmem>>, vector<24x288xf32>
    %394 = arith.truncf %393 : vector<24x288xf32> to vector<24x288xbf16>
    %c4_156 = arith.constant 4 : index
    %c0_157 = arith.constant 0 : index
    %c0_158 = arith.constant 0 : index
    %395 = vector.load %arg2[%c4_156, %c0_157, %c0_158] : memref<9x4x24xbf16, #tpu.memory_space<vmem>>, vector<1x4x24xbf16>
    %396 = vector.shape_cast %395 : vector<1x4x24xbf16> to vector<4x24xbf16>
    %cst_159 = arith.constant dense<0.000000e+00> : vector<4x288xf32>
    %397 = tpu.matmul %396, %394, %cst_159 {dimension_numbers = #tpu.dot_dimension_numbers<[1], [0], [0], [1], [0, 0, 1, 1], [], []>} : vector<4x24xbf16>, vector<24x288xbf16>, vector<4x288xf32> -> vector<4x288xf32>
    %398 = arith.addf %392, %397 : vector<4x288xf32>
    %c0_160 = arith.constant 0 : index
    %c20_161 = arith.constant 20 : index
    %399 = vector.load %arg4[%c0_160, %c20_161] : memref<24x384xf32, #tpu.memory_space<vmem>>, vector<24x288xf32>
    %400 = arith.truncf %399 : vector<24x288xf32> to vector<24x288xbf16>
    %c5 = arith.constant 5 : index
    %c0_162 = arith.constant 0 : index
    %c0_163 = arith.constant 0 : index
    %401 = vector.load %arg2[%c5, %c0_162, %c0_163] : memref<9x4x24xbf16, #tpu.memory_space<vmem>>, vector<1x4x24xbf16>
    %402 = vector.shape_cast %401 : vector<1x4x24xbf16> to vector<4x24xbf16>
    %cst_164 = arith.constant dense<0.000000e+00> : vector<4x288xf32>
    %403 = tpu.matmul %402, %400, %cst_164 {dimension_numbers = #tpu.dot_dimension_numbers<[1], [0], [0], [1], [0, 0, 1, 1], [], []>} : vector<4x24xbf16>, vector<24x288xbf16>, vector<4x288xf32> -> vector<4x288xf32>
    %404 = arith.addf %398, %403 : vector<4x288xf32>
    %c0_165 = arith.constant 0 : index
    %c36 = arith.constant 36 : index
    %405 = vector.load %arg4[%c0_165, %c36] : memref<24x384xf32, #tpu.memory_space<vmem>>, vector<24x288xf32>
    %406 = arith.truncf %405 : vector<24x288xf32> to vector<24x288xbf16>
    %c6 = arith.constant 6 : index
    %c0_166 = arith.constant 0 : index
    %c0_167 = arith.constant 0 : index
    %407 = vector.load %arg2[%c6, %c0_166, %c0_167] : memref<9x4x24xbf16, #tpu.memory_space<vmem>>, vector<1x4x24xbf16>
    %408 = vector.shape_cast %407 : vector<1x4x24xbf16> to vector<4x24xbf16>
    %cst_168 = arith.constant dense<0.000000e+00> : vector<4x288xf32>
    %409 = tpu.matmul %408, %406, %cst_168 {dimension_numbers = #tpu.dot_dimension_numbers<[1], [0], [0], [1], [0, 0, 1, 1], [], []>} : vector<4x24xbf16>, vector<24x288xbf16>, vector<4x288xf32> -> vector<4x288xf32>
    %410 = arith.addf %404, %409 : vector<4x288xf32>
    %c0_169 = arith.constant 0 : index
    %c37 = arith.constant 37 : index
    %411 = vector.load %arg4[%c0_169, %c37] : memref<24x384xf32, #tpu.memory_space<vmem>>, vector<24x288xf32>
    %412 = arith.truncf %411 : vector<24x288xf32> to vector<24x288xbf16>
    %c7 = arith.constant 7 : index
    %c0_170 = arith.constant 0 : index
    %c0_171 = arith.constant 0 : index
    %413 = vector.load %arg2[%c7, %c0_170, %c0_171] : memref<9x4x24xbf16, #tpu.memory_space<vmem>>, vector<1x4x24xbf16>
    %414 = vector.shape_cast %413 : vector<1x4x24xbf16> to vector<4x24xbf16>
    %cst_172 = arith.constant dense<0.000000e+00> : vector<4x288xf32>
    %415 = tpu.matmul %414, %412, %cst_172 {dimension_numbers = #tpu.dot_dimension_numbers<[1], [0], [0], [1], [0, 0, 1, 1], [], []>} : vector<4x24xbf16>, vector<24x288xbf16>, vector<4x288xf32> -> vector<4x288xf32>
    %416 = arith.addf %410, %415 : vector<4x288xf32>
    %c0_173 = arith.constant 0 : index
    %c38 = arith.constant 38 : index
    %417 = vector.load %arg4[%c0_173, %c38] : memref<24x384xf32, #tpu.memory_space<vmem>>, vector<24x288xf32>
    %418 = arith.truncf %417 : vector<24x288xf32> to vector<24x288xbf16>
    %c8_174 = arith.constant 8 : index
    %c0_175 = arith.constant 0 : index
    %c0_176 = arith.constant 0 : index
    %419 = vector.load %arg2[%c8_174, %c0_175, %c0_176] : memref<9x4x24xbf16, #tpu.memory_space<vmem>>, vector<1x4x24xbf16>
    %420 = vector.shape_cast %419 : vector<1x4x24xbf16> to vector<4x24xbf16>
    %cst_177 = arith.constant dense<0.000000e+00> : vector<4x288xf32>
    %421 = tpu.matmul %420, %418, %cst_177 {dimension_numbers = #tpu.dot_dimension_numbers<[1], [0], [0], [1], [0, 0, 1, 1], [], []>} : vector<4x24xbf16>, vector<24x288xbf16>, vector<4x288xf32> -> vector<4x288xf32>
    %422 = arith.addf %416, %421 : vector<4x288xf32>
    %c0_178 = arith.constant 0 : index
    %c0_179 = arith.constant 0 : index
    %c0_180 = arith.constant 0 : index
    %423 = vector.load %arg3[%c0_178, %c0_179, %c0_180] : memref<1x4x288xf32, #tpu.memory_space<vmem>>, vector<1x4x288xf32>
    %424 = vector.shape_cast %423 : vector<1x4x288xf32> to vector<4x288xf32>
    %425 = vector.shape_cast %422 : vector<4x288xf32> to vector<1x4x288xf32>
    tpu.vector_store %arg3[%c0_178, %c0_179, %c0_180], %425 {strides = array<i32>} : memref<1x4x288xf32, #tpu.memory_space<vmem>>, vector<1x4x288xf32>,
    return
  }
  func.func @transform_0(%arg0: i32) -> (i32, i32, i32) {
    %c0_i32 = arith.constant 0 : i32
    %c0_i32_0 = arith.constant 0 : i32
    %c0_i32_1 = arith.constant 0 : i32
    return %arg0, %c0_i32, %c0_i32_0 : i32, i32, i32
  }
  func.func @transform_1(%arg0: i32) -> (i32, i32, i32) {
    %c0_i32 = arith.constant 0 : i32
    %c0_i32_0 = arith.constant 0 : i32
    %c0_i32_1 = arith.constant 0 : i32
    %c0_i32_2 = arith.constant 0 : i32
    return %c0_i32, %c0_i32_0, %c0_i32_1 : i32, i32, i32
  }
  func.func @transform_2(%arg0: i32) -> (i32, i32, i32) {
    %c0_i32 = arith.constant 0 : i32
    %c0_i32_0 = arith.constant 0 : i32
    %c0_i32_1 = arith.constant 0 : i32
    return %arg0, %c0_i32, %c0_i32_0 : i32, i32, i32
  }
}

module attributes {stable_mosaic.version = 11 : i64} {
  func.func @_bn_add_relu_kernel(%arg0: i32, %arg1: memref<1x1x288xf32, #tpu.memory_space<vmem>>, %arg2: memref<2x4x288xf32, #tpu.memory_space<vmem>>, %arg3: memref<2x4x288xf32, #tpu.memory_space<vmem>>, %arg4: memref<2x4x288xf32, #tpu.memory_space<vmem>>) attributes {dimension_semantics = [#tpu.dimension_semantics<parallel>], iteration_bounds = array<i64: 1>, scalar_prefetch = 0 : i64, scratch_operands = 0 : i64, tpu.core_type = #tpu.core_type<tc>, window_params = [{pipeline_mode = #tpu.pipeline_mode<synchronous>, transform_indices = @transform_0, window_bounds = array<i64: 1, 1, 288>}, {transform_indices = @transform_1, window_bounds = array<i64: 2, 4, 288>}, {transform_indices = @transform_2, window_bounds = array<i64: 2, 4, 288>}, {transform_indices = @transform_3, window_bounds = array<i64: 2, 4, 288>}]} {
    %c0 = arith.constant 0 : index
    %c0_0 = arith.constant 0 : index
    %c0_1 = arith.constant 0 : index
    %0 = vector.load %arg2[%c0, %c0_0, %c0_1] : memref<2x4x288xf32, #tpu.memory_space<vmem>>, vector<2x4x288xf32>
    %c0_2 = arith.constant 0 : index
    %c0_3 = arith.constant 0 : index
    %c0_4 = arith.constant 0 : index
    %1 = vector.load %arg1[%c0_2, %c0_3, %c0_4] : memref<1x1x288xf32, #tpu.memory_space<vmem>>, vector<1x1x288xf32>
    %2 = vector.broadcast %1 : vector<1x1x288xf32> to vector<2x4x288xf32>
    %3 = arith.mulf %0, %2 : vector<2x4x288xf32>
    %cst = arith.constant dense<0.000000e+00> : vector<2x4xf32>
    %4 = vector.multi_reduction <add>, %3, %cst [2] : vector<2x4x288xf32> to vector<2x4xf32>
    %5 = vector.shape_cast %4 : vector<2x4xf32> to vector<2x4x1xf32>
    %cst_5 = arith.constant dense<0.000000e+00> : vector<4x1xf32>
    %6 = vector.multi_reduction <add>, %5, %cst_5 [0] : vector<2x4x1xf32> to vector<4x1xf32>
    %7 = vector.shape_cast %6 : vector<4x1xf32> to vector<1x4x1xf32>
    %cst_6 = arith.constant 0.001953125 : f32
    %8 = vector.broadcast %cst_6 : f32 to vector<1x4x1xf32>
    %9 = arith.mulf %7, %8 : vector<1x4x1xf32>
    %10 = vector.broadcast %9 : vector<1x4x1xf32> to vector<2x4x288xf32>
    %11 = arith.subf %0, %10 : vector<2x4x288xf32>
    %12 = arith.mulf %11, %11 : vector<2x4x288xf32>
    %13 = vector.broadcast %1 : vector<1x1x288xf32> to vector<2x4x288xf32>
    %14 = arith.mulf %12, %13 : vector<2x4x288xf32>
    %cst_7 = arith.constant dense<0.000000e+00> : vector<2x4xf32>
    %15 = vector.multi_reduction <add>, %14, %cst_7 [2] : vector<2x4x288xf32> to vector<2x4xf32>
    %16 = vector.shape_cast %15 : vector<2x4xf32> to vector<2x4x1xf32>
    %cst_8 = arith.constant dense<0.000000e+00> : vector<4x1xf32>
    %17 = vector.multi_reduction <add>, %16, %cst_8 [0] : vector<2x4x1xf32> to vector<4x1xf32>
    %18 = vector.shape_cast %17 : vector<4x1xf32> to vector<1x4x1xf32>
    %cst_9 = arith.constant 0.001953125 : f32
    %19 = vector.broadcast %cst_9 : f32 to vector<1x4x1xf32>
    %20 = arith.mulf %18, %19 : vector<1x4x1xf32>
    %cst_10 = arith.constant 9.99999974E-6 : f32
    %21 = vector.broadcast %cst_10 : f32 to vector<1x4x1xf32>
    %22 = arith.addf %20, %21 : vector<1x4x1xf32>
    %23 = math.rsqrt %22 : vector<1x4x1xf32>
    %24 = vector.broadcast %23 : vector<1x4x1xf32> to vector<2x4x288xf32>
    %25 = arith.mulf %11, %24 : vector<2x4x288xf32>
    %c0_11 = arith.constant 0 : index
    %c0_12 = arith.constant 0 : index
    %c0_13 = arith.constant 0 : index
    %26 = vector.load %arg3[%c0_11, %c0_12, %c0_13] : memref<2x4x288xf32, #tpu.memory_space<vmem>>, vector<2x4x288xf32>
    %27 = arith.addf %25, %26 : vector<2x4x288xf32>
    %cst_14 = arith.constant 0.000000e+00 : f32
    %28 = vector.broadcast %cst_14 : f32 to vector<2x4x288xf32>
    %29 = arith.maximumf %27, %28 : vector<2x4x288xf32>
    %c0_15 = arith.constant 0 : index
    %c0_16 = arith.constant 0 : index
    %c0_17 = arith.constant 0 : index
    %30 = vector.load %arg4[%c0_15, %c0_16, %c0_17] : memref<2x4x288xf32, #tpu.memory_space<vmem>>, vector<2x4x288xf32>
    tpu.vector_store %arg4[%c0_15, %c0_16, %c0_17], %29 {strides = array<i32>} : memref<2x4x288xf32, #tpu.memory_space<vmem>>, vector<2x4x288xf32>,
    return
  }
  func.func @transform_0(%arg0: i32) -> (i32, i32, i32) {
    %c0_i32 = arith.constant 0 : i32
    %c0_i32_0 = arith.constant 0 : i32
    %c0_i32_1 = arith.constant 0 : i32
    %c0_i32_2 = arith.constant 0 : i32
    return %c0_i32, %c0_i32_0, %c0_i32_1 : i32, i32, i32
  }
  func.func @transform_1(%arg0: i32) -> (i32, i32, i32) {
    %c0_i32 = arith.constant 0 : i32
    %c0_i32_0 = arith.constant 0 : i32
    %c0_i32_1 = arith.constant 0 : i32
    return %c0_i32, %arg0, %c0_i32_0 : i32, i32, i32
  }
  func.func @transform_2(%arg0: i32) -> (i32, i32, i32) {
    %c0_i32 = arith.constant 0 : i32
    %c0_i32_0 = arith.constant 0 : i32
    %c0_i32_1 = arith.constant 0 : i32
    return %c0_i32, %arg0, %c0_i32_0 : i32, i32, i32
  }
  func.func @transform_3(%arg0: i32) -> (i32, i32, i32) {
    %c0_i32 = arith.constant 0 : i32
    %c0_i32_0 = arith.constant 0 : i32
    %c0_i32_1 = arith.constant 0 : i32
    return %c0_i32, %arg0, %c0_i32_0 : i32, i32, i32
  }
}

</mosaic_0001>

<llo_original>
// kernel: basic_block_forward.5
$region0: #{basic_block_forward.5}
  #allocation0 [shape = 'u32[]', space=smem, size = 0x4, offset = 0x4, fixed_abs, tag = 'smem constant byte address 0x4 - core index']
  #allocation1 [shape = 'u32[144,128]{1,0:T(1,128)}', space=vmem, size = 0x12000, scoped, tag = 'internal scratch']
  %s0 = inlined_call_operand.vmem [shape: f32[1,1,288], index: 0, kind: input, shape index: {}]
  %s1 = inlined_call_operand.vmem [shape: f32[2,4,288], index: 1, kind: input, shape index: {}]
  %s2 = inlined_call_operand.vmem [shape: f32[2,4,288], index: 2, kind: output, shape index: {}]
  %s3 = sld [smem:[#allocation0]]
  $region18: #{basic_block_forward.5} parent=0
    _
  %s5 = ssub.s32 1, %s3
  %s6 = scalar_select 0, %s5, %s3
  // Predicated region
  $region2: #{basic_block_forward.5} parent=0 // pred_check
    _
  $region3: #{basic_block_forward.5} parent=0 // pred_check_branch
    %8 = sbr.rel (0) target = $region5
  $region4: #{basic_block_forward.5} parent=0 // pred_region
    _
  $region5: #{basic_block_forward.5} parent=0 // pred_fallthru
    _
  // Predicated region
  $region6: #{basic_block_forward.5} parent=0 // pred_check
    _
  $region7: #{basic_block_forward.5} parent=0 // pred_check_branch
    %10 = sbr.rel (0) target = $region9
  $region8: #{basic_block_forward.5} parent=0 // pred_region
    _
  $region9: #{basic_block_forward.5} parent=0 // pred_fallthru
    _
  %v11 = vld [vmem:[%s1] sm:$0xff]
  %v12 = vld [vmem:[%s1 + $0x8] sm:$0xf]
  %v13 = vld [vmem:[%s1 + $0xc] sm:$0xff]
  %v14 = vld [vmem:[%s1 + $0x14] sm:$0xf]
  %v15 = vld [vmem:[%s0] sm:$0x7]
  %v17 = vlaneseq
  %v18 = vshrl.u32 %v17, 7
  %v19 = vsub.s32 0, %v18
  %v20 = vrot.slane %v15, %v19
  %v21 = vlaneseq
  %v22 = vshrl.u32 %v21, 7
  %v23 = vsub.s32 1, %v22
  %v24 = vrot.slane %v15, %v23
  %v25 = vlaneseq
  %v26 = vshrl.u32 %v25, 7
  %v27 = vsub.s32 2, %v26
  %v28 = vrot.slane %v15, %v27
  %v30 = vcombine.low %v20, %v24
  %v32 = vmul.f32 %v11, %v30
  %v33 = vmul.f32 %v12, %v28
  %v34 = vmul.f32 %v13, %v30
  %v35 = vmul.f32 %v14, %v28
  %v38 = vcombine.high %v32, %v32
  %v39 = vcombine.high %v34, %v34
  %vm42 = vcmask 1043456
  %v43 = vsel %vm42, %v32, 0.0
  %v44 = vsel %vm42, %v38, 0.0
  %v45 = vadd.f32 %v43, %v44
  %vm46 = vcmask 257024
  %v47 = vsel %vm46, %v33, 0.0
  %v48 = vadd.f32 %v45, %v47
  %49 = vadd.xlane.f32.xlu0 %v48
  %v50 = vpop.xlane.xlu0 %49
  %v51 = vsel %vm42, %v34, 0.0
  %v52 = vsel %vm42, %v39, 0.0
  %v53 = vadd.f32 %v51, %v52
  %v54 = vsel %vm46, %v35, 0.0
  %v55 = vadd.f32 %v53, %v54
  %56 = vadd.xlane.f32.xlu0 %v55
  %v57 = vpop.xlane.xlu0 %56
  %v58 = vsel %vm42, %v50, 0.0
  %v59 = vsel %vm42, %v57, 0.0
  %v60 = vadd.f32 %v58, %v59
  %v61 = vmul.f32 %v60, 0.001953125
  %v64 = vunpack.c.l.s4 839922192
  %v65 = vunpack.c.0.s8 %v64
  %v66 = vlaneseq
  %v67 = vshrl.u32 %v66, 7
  %v68 = vsub.s32 %v65, %v67
  %v69 = vrot.slane %v61, %v68
  %v71 = vsub.f32 %v11, %v69
  %v72 = vsub.f32 %v12, %v69
  %v73 = vsub.f32 %v13, %v69
  %v74 = vsub.f32 %v14, %v69
  %v75 = vmul.f32 %v71, %v71
  %v76 = vmul.f32 %v72, %v72
  %v77 = vmul.f32 %v73, %v73
  %v78 = vmul.f32 %v74, %v74
  %v79 = vmul.f32 %v75, %v30
  %v80 = vmul.f32 %v76, %v28
  %v81 = vmul.f32 %v77, %v30
  %v82 = vmul.f32 %v78, %v28
  %v85 = vcombine.high %v79, %v79
  %v86 = vcombine.high %v81, %v81
  %v89 = vsel %vm42, %v79, 0.0
  %v90 = vsel %vm42, %v85, 0.0
  %v91 = vadd.f32 %v89, %v90
  %v92 = vsel %vm46, %v80, 0.0
  %v93 = vadd.f32 %v91, %v92
  %94 = vadd.xlane.f32.xlu0 %v93
  %v95 = vpop.xlane.xlu0 %94
  %v96 = vsel %vm42, %v81, 0.0
  %v97 = vsel %vm42, %v86, 0.0
  %v98 = vadd.f32 %v96, %v97
  %v99 = vsel %vm46, %v82, 0.0
  %v100 = vadd.f32 %v98, %v99
  %101 = vadd.xlane.f32.xlu0 %v100
  %v102 = vpop.xlane.xlu0 %101
  %v103 = vsel %vm42, %v95, 0.0
  %v104 = vsel %vm42, %v102, 0.0
  %v105 = vadd.f32 %v103, %v104
  %v106 = vmul.f32 %v105, 0.001953125
  %v107 = vadd.f32 %v106, 1e-05
  %v108 = vrsqrt.pop %v107
  %v111 = vunpack.c.l.s4 839922192
  %v112 = vunpack.c.0.s8 %v111
  %v113 = vlaneseq
  %v114 = vshrl.u32 %v113, 7
  %v115 = vsub.s32 %v112, %v114
  %v116 = vrot.slane %v108, %v115
  %v118 = vmul.f32 %v71, %v116
  %v119 = vmul.f32 %v72, %v116
  %v120 = vmul.f32 %v73, %v116
  %v121 = vmul.f32 %v74, %v116
  %v122 = vmax.f32 %v118, 0.0
  %v123 = vmax.f32 %v119, 0.0
  %v124 = vmax.f32 %v120, 0.0
  %v125 = vmax.f32 %v121, 0.0
  %126 = vst [vmem:[%s2] sm:$0xff] %v122
  %127 = vst.msk [vmem:[%s2 + $0x8] sm:$0xf] %vm46, %v123
  %128 = vst [vmem:[%s2 + $0xc] sm:$0xff] %v124
  %129 = vst.msk [vmem:[%s2 + $0x14] sm:$0xf] %vm46, %v125
  // Predicated region
  $region10: #{basic_block_forward.5} parent=0 // pred_check
    _
  $region11: #{basic_block_forward.5} parent=0 // pred_check_branch
    %131 = sbr.rel (0) target = $region13
  $region12: #{basic_block_forward.5} parent=0 // pred_region
    _
  $region13: #{basic_block_forward.5} parent=0 // pred_fallthru
    _
  // Predicated region
  $region14: #{basic_block_forward.5} parent=0 // pred_check
    _
  $region15: #{basic_block_forward.5} parent=0 // pred_check_branch
    %133 = sbr.rel (0) target = $region17
  $region16: #{basic_block_forward.5} parent=0 // pred_region
    _
  $region17: #{basic_block_forward.5} parent=0 // pred_fallthru
    _

// kernel: basic_block_forward.7
$region0: #{basic_block_forward.7}
  #allocation0 [shape = 'u32[]', space=smem, size = 0x4, offset = 0x4, fixed_abs, tag = 'smem constant byte address 0x4 - core index']
  #allocation1 [shape = 'u32[144,128]{1,0:T(1,128)}', space=vmem, size = 0x12000, scoped, tag = 'internal scratch']
  %s0 = inlined_call_operand.vmem [shape: f32[1,1,288], index: 0, kind: input, shape index: {}]
  %s1 = inlined_call_operand.vmem [shape: f32[2,4,288], index: 1, kind: input, shape index: {}]
  %s2 = inlined_call_operand.vmem [shape: f32[2,4,288], index: 2, kind: input, shape index: {}]
  %s3 = inlined_call_operand.vmem [shape: f32[2,4,288], index: 3, kind: output, shape index: {}]
  %s4 = sld [smem:[#allocation0]]
  $region22: #{basic_block_forward.7} parent=0
    _
  %s6 = ssub.s32 1, %s4
  %s7 = scalar_select 0, %s6, %s4
  // Predicated region
  $region2: #{basic_block_forward.7} parent=0 // pred_check
    _
  $region3: #{basic_block_forward.7} parent=0 // pred_check_branch
    %9 = sbr.rel (0) target = $region5
  $region4: #{basic_block_forward.7} parent=0 // pred_region
    _
  $region5: #{basic_block_forward.7} parent=0 // pred_fallthru
    _
  // Predicated region
  $region6: #{basic_block_forward.7} parent=0 // pred_check
    _
  $region7: #{basic_block_forward.7} parent=0 // pred_check_branch
    %11 = sbr.rel (0) target = $region9
  $region8: #{basic_block_forward.7} parent=0 // pred_region
    _
  $region9: #{basic_block_forward.7} parent=0 // pred_fallthru
    _
  // Predicated region
  $region10: #{basic_block_forward.7} parent=0 // pred_check
    _
  $region11: #{basic_block_forward.7} parent=0 // pred_check_branch
    %13 = sbr.rel (0) target = $region13
  $region12: #{basic_block_forward.7} parent=0 // pred_region
    _
  $region13: #{basic_block_forward.7} parent=0 // pred_fallthru
    _
  %v14 = vld [vmem:[%s1] sm:$0xff]
  %v15 = vld [vmem:[%s1 + $0x8] sm:$0xf]
  %v16 = vld [vmem:[%s1 + $0xc] sm:$0xff]
  %v17 = vld [vmem:[%s1 + $0x14] sm:$0xf]
  %v18 = vld [vmem:[%s0] sm:$0x7]
  %v20 = vlaneseq
  %v21 = vshrl.u32 %v20, 7
  %v22 = vsub.s32 0, %v21
  %v23 = vrot.slane %v18, %v22
  %v24 = vlaneseq
  %v25 = vshrl.u32 %v24, 7
  %v26 = vsub.s32 1, %v25
  %v27 = vrot.slane %v18, %v26
  %v28 = vlaneseq
  %v29 = vshrl.u32 %v28, 7
  %v30 = vsub.s32 2, %v29
  %v31 = vrot.slane %v18, %v30
  %v33 = vcombine.low %v23, %v27
  %v35 = vmul.f32 %v14, %v33
  %v36 = vmul.f32 %v15, %v31
  %v37 = vmul.f32 %v16, %v33
  %v38 = vmul.f32 %v17, %v31
  %v41 = vcombine.high %v35, %v35
  %v42 = vcombine.high %v37, %v37
  %vm45 = vcmask 1043456
  %v46 = vsel %vm45, %v35, 0.0
  %v47 = vsel %vm45, %v41, 0.0
  %v48 = vadd.f32 %v46, %v47
  %vm49 = vcmask 257024
  %v50 = vsel %vm49, %v36, 0.0
  %v51 = vadd.f32 %v48, %v50
  %52 = vadd.xlane.f32.xlu0 %v51
  %v53 = vpop.xlane.xlu0 %52
  %v54 = vsel %vm45, %v37, 0.0
  %v55 = vsel %vm45, %v42, 0.0
  %v56 = vadd.f32 %v54, %v55
  %v57 = vsel %vm49, %v38, 0.0
  %v58 = vadd.f32 %v56, %v57
  %59 = vadd.xlane.f32.xlu0 %v58
  %v60 = vpop.xlane.xlu0 %59
  %v61 = vsel %vm45, %v53, 0.0
  %v62 = vsel %vm45, %v60, 0.0
  %v63 = vadd.f32 %v61, %v62
  %v64 = vmul.f32 %v63, 0.001953125
  %v67 = vunpack.c.l.s4 839922192
  %v68 = vunpack.c.0.s8 %v67
  %v69 = vlaneseq
  %v70 = vshrl.u32 %v69, 7
  %v71 = vsub.s32 %v68, %v70
  %v72 = vrot.slane %v64, %v71
  %v74 = vsub.f32 %v14, %v72
  %v75 = vsub.f32 %v15, %v72
  %v76 = vsub.f32 %v16, %v72
  %v77 = vsub.f32 %v17, %v72
  %v78 = vmul.f32 %v74, %v74
  %v79 = vmul.f32 %v75, %v75
  %v80 = vmul.f32 %v76, %v76
  %v81 = vmul.f32 %v77, %v77
  %v82 = vmul.f32 %v78, %v33
  %v83 = vmul.f32 %v79, %v31
  %v84 = vmul.f32 %v80, %v33
  %v85 = vmul.f32 %v81, %v31
  %v88 = vcombine.high %v82, %v82
  %v89 = vcombine.high %v84, %v84
  %v92 = vsel %vm45, %v82, 0.0
  %v93 = vsel %vm45, %v88, 0.0
  %v94 = vadd.f32 %v92, %v93
  %v95 = vsel %vm49, %v83, 0.0
  %v96 = vadd.f32 %v94, %v95
  %97 = vadd.xlane.f32.xlu0 %v96
  %v98 = vpop.xlane.xlu0 %97
  %v99 = vsel %vm45, %v84, 0.0
  %v100 = vsel %vm45, %v89, 0.0
  %v101 = vadd.f32 %v99, %v100
  %v102 = vsel %vm49, %v85, 0.0
  %v103 = vadd.f32 %v101, %v102
  %104 = vadd.xlane.f32.xlu0 %v103
  %v105 = vpop.xlane.xlu0 %104
  %v106 = vsel %vm45, %v98, 0.0
  %v107 = vsel %vm45, %v105, 0.0
  %v108 = vadd.f32 %v106, %v107
  %v109 = vmul.f32 %v108, 0.001953125
  %v110 = vadd.f32 %v109, 1e-05
  %v111 = vrsqrt.pop %v110
  %v114 = vunpack.c.l.s4 839922192
  %v115 = vunpack.c.0.s8 %v114
  %v116 = vlaneseq
  %v117 = vshrl.u32 %v116, 7
  %v118 = vsub.s32 %v115, %v117
  %v119 = vrot.slane %v111, %v118
  %v121 = vmul.f32 %v74, %v119
  %v122 = vmul.f32 %v75, %v119
  %v123 = vmul.f32 %v76, %v119
  %v124 = vmul.f32 %v77, %v119
  %v125 = vld [vmem:[%s2] sm:$0xff]
  %v126 = vld [vmem:[%s2 + $0x8] sm:$0xf]
  %v127 = vld [vmem:[%s2 + $0xc] sm:$0xff]
  %v128 = vld [vmem:[%s2 + $0x14] sm:$0xf]
  %v129 = vadd.f32 %v121, %v125
  %v130 = vadd.f32 %v122, %v126
  %v131 = vadd.f32 %v123, %v127
  %v132 = vadd.f32 %v124, %v128
  %v133 = vmax.f32 %v129, 0.0
  %v134 = vmax.f32 %v130, 0.0
  %v135 = vmax.f32 %v131, 0.0
  %v136 = vmax.f32 %v132, 0.0
  %137 = vst [vmem:[%s3] sm:$0xff] %v133
  %138 = vst.msk [vmem:[%s3 + $0x8] sm:$0xf] %vm49, %v134
  %139 = vst [vmem:[%s3 + $0xc] sm:$0xff] %v135
  %140 = vst.msk [vmem:[%s3 + $0x14] sm:$0xf] %vm49, %v136
  // Predicated region
  $region14: #{basic_block_forward.7} parent=0 // pred_check
    _
  $region15: #{basic_block_forward.7} parent=0 // pred_check_branch
    %142 = sbr.rel (0) target = $region17
  $region16: #{basic_block_forward.7} parent=0 // pred_region
    _
  $region17: #{basic_block_forward.7} parent=0 // pred_fallthru
    _
  // Predicated region
  $region18: #{basic_block_forward.7} parent=0 // pred_check
    _
  $region19: #{basic_block_forward.7} parent=0 // pred_check_branch
    %144 = sbr.rel (0) target = $region21
  $region20: #{basic_block_forward.7} parent=0 // pred_region
    _
  $region21: #{basic_block_forward.7} parent=0 // pred_fallthru
    _

// kernel: basic_block_forward.4
$region0: #{basic_block_forward.4}
  #allocation0 [shape = 'u32[]', space=smem, size = 0x4, offset = 0x4, fixed_abs, tag = 'smem constant byte address 0x4 - core index']
  #allocation1 [shape = 'u32[144,128]{1,0:T(1,128)}', space=vmem, size = 0x12000, scoped, tag = 'internal scratch']
  #allocation2 [shape = 'f32[24,384]{1,0:T(8,128)}', space=vmem, size = 0x9000, scoped, tag = 'scratch operand']
  %s0 = inlined_call_operand.vmem [shape: f32[2,4,384], index: 0, kind: input, shape index: {}]
  %s1 = inlined_call_operand.vmem [shape: bf16[9,4,24], index: 1, kind: input, shape index: {}]
  %s2 = inlined_call_operand.vmem [shape: f32[2,4,288], index: 2, kind: output, shape index: {}]
  %s3 = sld [smem:[#allocation0]]
  $region41: #{basic_block_forward.4} parent=0
    _
  %s5 = ssub.s32 1, %s3
  %s6 = scalar_select 0, %s5, %s3
  loop: start=0, step=1, limit=4
  $region2: #{basic_block_forward.4} parent=0 // loop_pre_header
    _
  $region3: #{basic_block_forward.4} parent=0 // loop_header
    %s8 = sphi 0, %s12
    %p9 = scmp.ge.s32.totalorder %s8, 4
    %s18 = sphi 0, %s20
    %s21 = sphi 0, %s18
    %s22 = sphi 0, %s21
    %s38 = sphi 0, %s22
    %s42 = sphi 0, %s42
    %s44 = sphi 0, %s42
    %s45 = sphi 0, %s44
    %s59 = sphi 0, %s45
    %s65 = sphi 0, %s67
    %s68 = sphi 0, %s65
    %s69 = sphi 0, %s68
    %s85 = sphi 0, %s69
  $region4: #{basic_block_forward.4} parent=0 // loop_header_branch
    %11 = sbr.rel (%p9) target = $region8
  $region5: #{basic_block_forward.4} parent=0 // loop_body
    %s13 = ssub.s32 %s8, 1
    %s14 = ssub.s32 %s8, 2
    %s15 = sadd.s32 %s8, 1
    %s16 = ssub.s32 %s8, %s15
    %p17 = scmp.eq.s32.totalorder %s16, 0
    %s19 = sadd.s32 %s18, 1
    %s20 = scalar_select %p17, %s18, %s19
    %p23 = pneg %p17
    %p24 = scmp.eq.s32.totalorder %s8, 1
    %p25 = por %p23, %p24
    %p26 = scmp.ne.s32.totalorder %s18, %s21
    %p27 = scmp.eq.s32.totalorder %s8, 0
    %p28 = por %p26, %p27
    %p29 = scmp.ne.s32.totalorder %s18, %s21
    %p30 = scmp.eq.s32.totalorder %s13, 1
    %p31 = por %p29, %p30
    %p32 = scmp.ne.s32.totalorder %s21, %s22
    %p33 = scmp.eq.s32.totalorder %s13, 0
    %p34 = por %p32, %p33
    %p35 = scmp.ne.s32.totalorder %s21, %s22
    %p36 = scmp.eq.s32.totalorder %s14, 1
    %p37 = por %p35, %p36
    %p39 = scmp.ne.s32.totalorder %s22, %s38
    %p40 = scmp.eq.s32.totalorder %s14, 0
    %p41 = por %p39, %p40
    %s43 = sadd.s32 %s42, 1
    %p46 = scmp.eq.s32.totalorder %s8, 1
    %p47 = scmp.ne.s32.totalorder %s42, %s44
    %p48 = scmp.eq.s32.totalorder %s8, 0
    %p49 = por %p47, %p48
    %p50 = scmp.ne.s32.totalorder %s42, %s44
    %p51 = scmp.eq.s32.totalorder %s13, 1
    %p52 = por %p50, %p51
    %p53 = scmp.ne.s32.totalorder %s44, %s45
    %p54 = scmp.eq.s32.totalorder %s13, 0
    %p55 = por %p53, %p54
    %p56 = scmp.ne.s32.totalorder %s44, %s45
    %p57 = scmp.eq.s32.totalorder %s14, 1
    %p58 = por %p56, %p57
    %p60 = scmp.ne.s32.totalorder %s45, %s59
    %p61 = scmp.eq.s32.totalorder %s14, 0
    %p62 = por %p60, %p61
    %s63 = ssub.s32 %s8, %s15
    %p64 = scmp.eq.s32.totalorder %s63, 0
    %s66 = sadd.s32 %s65, 1
    %s67 = scalar_select %p64, %s65, %s66
    %p70 = pneg %p64
    %p71 = scmp.eq.s32.totalorder %s8, 1
    %p72 = por %p70, %p71
    %p73 = scmp.ne.s32.totalorder %s65, %s68
    %p74 = scmp.eq.s32.totalorder %s8, 0
    %p75 = por %p73, %p74
    %p76 = scmp.ne.s32.totalorder %s65, %s68
    %p77 = scmp.eq.s32.totalorder %s13, 1
    %p78 = por %p76, %p77
    %p79 = scmp.ne.s32.totalorder %s68, %s69
    %p80 = scmp.eq.s32.totalorder %s13, 0
    %p81 = por %p79, %p80
    %p82 = scmp.ne.s32.totalorder %s68, %s69
    %p83 = scmp.eq.s32.totalorder %s14, 1
    %p84 = por %p82, %p83
    %p86 = scmp.ne.s32.totalorder %s69, %s85
    %p87 = scmp.eq.s32.totalorder %s14, 0
    %p88 = por %p86, %p87
    %p89 = scmp.le.s32.totalorder 1, %s8
    %p90 = scmp.lt.s32.totalorder %s8, 3
    %p91 = pnand %p89, %p90
    %p92 = pneg %p91
    // Predicated region
    $region9: #{basic_block_forward.4} parent=5 // pred_check
      _
    $region10: #{basic_block_forward.4} parent=5 // pred_check_branch
      %94 = sbr.rel (%p91) target = $region12
    $region11: #{basic_block_forward.4} parent=5 // pred_region
      %s95 = ssub.s32 %s8, 1
      // Predicated region
      $region13: #{basic_block_forward.4} parent=11 // pred_check
        %p96 = pneg %p55
      $region14: #{basic_block_forward.4} parent=11 // pred_check_branch
        %98 = sbr.rel (%p96) target = $region16
      $region15: #{basic_block_forward.4} parent=11 // pred_region
        _
      $region16: #{basic_block_forward.4} parent=11 // pred_fallthru
        _
    $region12: #{basic_block_forward.4} parent=5 // pred_fallthru
      _
    %p99 = scmp.lt.s32.totalorder %s8, 2
    // Predicated region
    $region17: #{basic_block_forward.4} parent=5 // pred_check
      %p100 = pneg %p99
    $region18: #{basic_block_forward.4} parent=5 // pred_check_branch
      %102 = sbr.rel (%p100) target = $region20
    $region19: #{basic_block_forward.4} parent=5 // pred_region
      // Predicated region
      $region21: #{basic_block_forward.4} parent=19 // pred_check
        %p103 = pneg %p28
      $region22: #{basic_block_forward.4} parent=19 // pred_check_branch
        %105 = sbr.rel (%p103) target = $region24
      $region23: #{basic_block_forward.4} parent=19 // pred_region
        %p106 = scmp.lt.s32.totalorder %s8, 1
        %s107 = scalar_select %p106, %s8, 1
        %s108 = smul.addr %s107, 3
        %s109 = smul.addr %s108, 4
        %s110 = scalar_lea.vmem %s0, %s109
      $region24: #{basic_block_forward.4} parent=19 // pred_fallthru
        _
    $region20: #{basic_block_forward.4} parent=5 // pred_fallthru
      _
    %p111 = scmp.le.s32.totalorder 1, %s8
    %p112 = scmp.lt.s32.totalorder %s8, 3
    %p113 = pnand %p111, %p112
    %p114 = pneg %p113
    // Predicated region
    $region25: #{basic_block_forward.4} parent=5 // pred_check
      _
    $region26: #{basic_block_forward.4} parent=5 // pred_check_branch
      %116 = sbr.rel (%p113) target = $region28
    $region27: #{basic_block_forward.4} parent=5 // pred_region
      %s117 = ssub.s32 %s8, 1
      %p118 = scmp.lt.s32.totalorder %s13, 1
      %s119 = scalar_select %p118, %s13, 1
      %s120 = smul.addr %s119, 3
      %s121 = smul.addr %s120, 4
      %s122 = scalar_lea.vmem %s0, %s121
      %p123 = pneg %p34
      %p124 = pneg %p31
      %p125 = pneg %p55
      %p126 = pneg %p52
      %p127 = pneg %p81
      %p128 = pneg %p78
      %p129 = scmp.lt.s32.totalorder %s13, 1
      %s130 = scalar_select %p129, %s13, 1
      %s131 = smul.addr %s130, 3
      %s132 = smul.addr %s131, 4
      %s133 = scalar_lea.vmem %s2, %s132
      %p134 = scmp.lt.s32.totalorder %s13, 1
      %s135 = scalar_select %p134, %s13, 1
      %s136 = smul.addr %s135, 3
      %s137 = smul.addr %s136, 4
      %s138 = scalar_lea.vmem %s0, %s137
      %p139 = scmp.lt.s32.totalorder %s13, 1
      %s140 = scalar_select %p139, %s13, 1
      %s141 = smul.addr %s140, 3
      %s142 = smul.addr %s141, 4
      %s143 = scalar_lea.vmem %s2, %s142
      %v145 = vld [vmem:[%s138] sm:$0xff]
      %v146 = vld [vmem:[%s138 + $0x8] sm:$0xf]
      %vm147 = vcmp.ge.f32.partialorder %v145, 0.0
      %vm148 = vcmp.ge.f32.partialorder %v146, 0.0
      %vm149 = vcmp.lt.f32.partialorder %v145, 0.125
      %vm150 = vcmp.lt.f32.partialorder %v146, 0.125
      %vm151 = vmand %vm147, %vm149
      %vm152 = vmand %vm148, %vm150
      %v153 = vsel %vm151, 1, 0
      %v154 = vsel %vm152, 1, 0
      %v155 = vcvt.s32.f32 %v153
      %v156 = vcvt.s32.f32 %v154
      %vm157 = vcmp.ge.f32.partialorder %v145, 0.125
      %vm158 = vcmp.ge.f32.partialorder %v146, 0.125
      %vm159 = vcmp.lt.f32.partialorder %v145, 0.25
      %vm160 = vcmp.lt.f32.partialorder %v146, 0.25
      %vm161 = vmand %vm157, %vm159
      %vm162 = vmand %vm158, %vm160
      %v163 = vsel %vm161, 1, 0
      %v164 = vsel %vm162, 1, 0
      %v165 = vcvt.s32.f32 %v163
      %v166 = vcvt.s32.f32 %v164
      %vm167 = vcmp.ge.f32.partialorder %v145, 0.25
      %vm168 = vcmp.ge.f32.partialorder %v146, 0.25
      %vm169 = vcmp.lt.f32.partialorder %v145, 0.375
      %vm170 = vcmp.lt.f32.partialorder %v146, 0.375
      %vm171 = vmand %vm167, %vm169
      %vm172 = vmand %vm168, %vm170
      %v173 = vsel %vm171, 1, 0
      %v174 = vsel %vm172, 1, 0
      %v175 = vcvt.s32.f32 %v173
      %v176 = vcvt.s32.f32 %v174
      %v177 = vmul.f32 %v145, 8.0
      %v178 = vmul.f32 %v146, 8.0
      %v179 = vmul.f32 %v177, %v155
      %v180 = vmul.f32 %v178, %v156
      %v181 = vadd.f32 %v179, 0.0
      %v182 = vadd.f32 %v180, 0.0
      %v183 = vsub.f32 0.25, %v145
      %v184 = vsub.f32 0.25, %v146
      %v185 = vmul.f32 %v183, 8.0
      %v186 = vmul.f32 %v184, 8.0
      %v187 = vmul.f32 %v185, %v165
      %v188 = vmul.f32 %v186, %v166
      %v189 = vadd.f32 %v181, %v187
      %v190 = vadd.f32 %v182, %v188
      %v191 = vsub.f32 %v145, 0.125
      %v192 = vsub.f32 %v146, 0.125
      %v193 = vmul.f32 %v191, 8.0
      %v194 = vmul.f32 %v192, 8.0
      %v195 = vmul.f32 %v193, %v165
      %v196 = vmul.f32 %v194, %v166
      %v197 = vadd.f32 %v195, 0.0
      %v198 = vadd.f32 %v196, 0.0
      %v199 = vsub.f32 0.375, %v145
      %v200 = vsub.f32 0.375, %v146
      %v201 = vmul.f32 %v199, 8.0
      %v202 = vmul.f32 %v200, 8.0
      %v203 = vmul.f32 %v201, %v175
      %v204 = vmul.f32 %v202, %v176
      %v205 = vadd.f32 %v197, %v203
      %v206 = vadd.f32 %v198, %v204
      %v207 = vmul.f32 %v145, 4.0
      %v208 = vmul.f32 %v146, 4.0
      %v209 = vmul.f32 %v207, %v189
      %v210 = vmul.f32 %v208, %v190
      %v211 = vadd.f32 %v209, 0.0
      %v212 = vadd.f32 %v210, 0.0
      %v213 = vmul.f32 %v199, 4.0
      %v214 = vmul.f32 %v200, 4.0
      %v215 = vmul.f32 %v213, %v205
      %v216 = vmul.f32 %v214, %v206
      %v217 = vadd.f32 %v211, %v215
      %v218 = vadd.f32 %v212, %v216
      %v220 = vcombine.high %v217, %v217
      %222 = vst [vmem:[#allocation2] sm:$0xf] %v217
      %223 = vst [vmem:[#allocation2 + $0x8] sm:$0xf] %v220
      %224 = vst [vmem:[#allocation2 + $0x10] sm:$0xf] %v218
      %vm225 = vcmp.ge.f32.partialorder %v145, 0.375
      %vm226 = vcmp.ge.f32.partialorder %v146, 0.375
      %vm227 = vcmp.lt.f32.partialorder %v145, 0.5
      %vm228 = vcmp.lt.f32.partialorder %v146, 0.5
      %vm229 = vmand %vm225, %vm227
      %vm230 = vmand %vm226, %vm228
      %v231 = vsel %vm229, 1, 0
      %v232 = vsel %vm230, 1, 0
      %v233 = vcvt.s32.f32 %v231
      %v234 = vcvt.s32.f32 %v232
      %v235 = vsub.f32 %v145, 0.25
      %v236 = vsub.f32 %v146, 0.25
      %v237 = vmul.f32 %v235, 8.0
      %v238 = vmul.f32 %v236, 8.0
      %v239 = vmul.f32 %v237, %v175
      %v240 = vmul.f32 %v238, %v176
      %v241 = vadd.f32 %v239, 0.0
      %v242 = vadd.f32 %v240, 0.0
      %v243 = vsub.f32 0.5, %v145
      %v244 = vsub.f32 0.5, %v146
      %v245 = vmul.f32 %v243, 8.0
      %v246 = vmul.f32 %v244, 8.0
      %v247 = vmul.f32 %v245, %v233
      %v248 = vmul.f32 %v246, %v234
      %v249 = vadd.f32 %v241, %v247
      %v250 = vadd.f32 %v242, %v248
      %v251 = vmul.f32 %v191, 4.0
      %v252 = vmul.f32 %v192, 4.0
      %v253 = vmul.f32 %v251, %v205
      %v254 = vmul.f32 %v252, %v206
      %v255 = vadd.f32 %v253, 0.0
      %v256 = vadd.f32 %v254, 0.0
      %v257 = vmul.f32 %v243, 4.0
      %v258 = vmul.f32 %v244, 4.0
      %v259 = vmul.f32 %v257, %v249
      %v260 = vmul.f32 %v258, %v250
      %v261 = vadd.f32 %v255, %v259
      %v262 = vadd.f32 %v256, %v260
      %v265 = vcombine.low %v261, %v261
      %v266 = vcombine.low %v262, %v262
      %269 = vst [vmem:[#allocation2] sm:$0xf0] %v265
      %270 = vst [vmem:[#allocation2 + $0x8] sm:$0xf0] %v261
      %271 = vst [vmem:[#allocation2 + $0x10] sm:$0xf0] %v266
      %vm272 = vcmp.ge.f32.partialorder %v145, 0.5
      %vm273 = vcmp.ge.f32.partialorder %v146, 0.5
      %vm274 = vcmp.lt.f32.partialorder %v145, 0.625
      %vm275 = vcmp.lt.f32.partialorder %v146, 0.625
      %vm276 = vmand %vm272, %vm274
      %vm277 = vmand %vm273, %vm275
      %v278 = vsel %vm276, 1, 0
      %v279 = vsel %vm277, 1, 0
      %v280 = vcvt.s32.f32 %v278
      %v281 = vcvt.s32.f32 %v279
      %v282 = vsub.f32 %v145, 0.375
      %v283 = vsub.f32 %v146, 0.375
      %v284 = vmul.f32 %v282, 8.0
      %v285 = vmul.f32 %v283, 8.0
      %v286 = vmul.f32 %v284, %v233
      %v287 = vmul.f32 %v285, %v234
      %v288 = vadd.f32 %v286, 0.0
      %v289 = vadd.f32 %v287, 0.0
      %v290 = vsub.f32 0.625, %v145
      %v291 = vsub.f32 0.625, %v146
      %v292 = vmul.f32 %v290, 8.0
      %v293 = vmul.f32 %v291, 8.0
      %v294 = vmul.f32 %v292, %v280
      %v295 = vmul.f32 %v293, %v281
      %v296 = vadd.f32 %v288, %v294
      %v297 = vadd.f32 %v289, %v295
      %v298 = vmul.f32 %v235, 4.0
      %v299 = vmul.f32 %v236, 4.0
      %v300 = vmul.f32 %v298, %v249
      %v301 = vmul.f32 %v299, %v250
      %v302 = vadd.f32 %v300, 0.0
      %v303 = vadd.f32 %v301, 0.0
      %v304 = vmul.f32 %v290, 4.0
      %v305 = vmul.f32 %v291, 4.0
      %v306 = vmul.f32 %v304, %v296
      %v307 = vmul.f32 %v305, %v297
      %v308 = vadd.f32 %v302, %v306
      %v309 = vadd.f32 %v303, %v307
      %v311 = vcombine.high %v308, %v308
      %313 = vst [vmem:[#allocation2 + $0x18] sm:$0xf] %v308
      %314 = vst [vmem:[#allocation2 + $0x20] sm:$0xf] %v311
      %315 = vst [vmem:[#allocation2 + $0x28] sm:$0xf] %v309
      %vm316 = vcmp.ge.f32.partialorder %v145, 0.625
      %vm317 = vcmp.ge.f32.partialorder %v146, 0.625
      %vm318 = vcmp.lt.f32.partialorder %v145, 0.75
      %vm319 = vcmp.lt.f32.partialorder %v146, 0.75
      %vm320 = vmand %vm316, %vm318
      %vm321 = vmand %vm317, %vm319
      %v322 = vsel %vm320, 1, 0
      %v323 = vsel %vm321, 1, 0
      %v324 = vcvt.s32.f32 %v322
      %v325 = vcvt.s32.f32 %v323
      %v326 = vsub.f32 %v145, 0.5
      %v327 = vsub.f32 %v146, 0.5
      %v328 = vmul.f32 %v326, 8.0
      %v329 = vmul.f32 %v327, 8.0
      %v330 = vmul.f32 %v328, %v280
      %v331 = vmul.f32 %v329, %v281
      %v332 = vadd.f32 %v330, 0.0
      %v333 = vadd.f32 %v331, 0.0
      %v334 = vsub.f32 0.75, %v145
      %v335 = vsub.f32 0.75, %v146
      %v336 = vmul.f32 %v334, 8.0
      %v337 = vmul.f32 %v335, 8.0
      %v338 = vmul.f32 %v336, %v324
      %v339 = vmul.f32 %v337, %v325
      %v340 = vadd.f32 %v332, %v338
      %v341 = vadd.f32 %v333, %v339
      %v342 = vmul.f32 %v282, 4.0
      %v343 = vmul.f32 %v283, 4.0
      %v344 = vmul.f32 %v342, %v296
      %v345 = vmul.f32 %v343, %v297
      %v346 = vadd.f32 %v344, 0.0
      %v347 = vadd.f32 %v345, 0.0
      %v348 = vmul.f32 %v334, 4.0
      %v349 = vmul.f32 %v335, 4.0
      %v350 = vmul.f32 %v348, %v340
      %v351 = vmul.f32 %v349, %v341
      %v352 = vadd.f32 %v346, %v350
      %v353 = vadd.f32 %v347, %v351
      %v356 = vcombine.low %v352, %v352
      %v357 = vcombine.low %v353, %v353
      %360 = vst [vmem:[#allocation2 + $0x18] sm:$0xf0] %v356
      %361 = vst [vmem:[#allocation2 + $0x20] sm:$0xf0] %v352
      %362 = vst [vmem:[#allocation2 + $0x28] sm:$0xf0] %v357
      %vm363 = vcmp.ge.f32.partialorder %v145, 0.75
      %vm364 = vcmp.ge.f32.partialorder %v146, 0.75
      %vm365 = vcmp.lt.f32.partialorder %v145, 0.875
      %vm366 = vcmp.lt.f32.partialorder %v146, 0.875
      %vm367 = vmand %vm363, %vm365
      %vm368 = vmand %vm364, %vm366
      %v369 = vsel %vm367, 1, 0
      %v370 = vsel %vm368, 1, 0
      %v371 = vcvt.s32.f32 %v369
      %v372 = vcvt.s32.f32 %v370
      %v373 = vsub.f32 %v145, 0.625
      %v374 = vsub.f32 %v146, 0.625
      %v375 = vmul.f32 %v373, 8.0
      %v376 = vmul.f32 %v374, 8.0
      %v377 = vmul.f32 %v375, %v324
      %v378 = vmul.f32 %v376, %v325
      %v379 = vadd.f32 %v377, 0.0
      %v380 = vadd.f32 %v378, 0.0
      %v381 = vsub.f32 0.875, %v145
      %v382 = vsub.f32 0.875, %v146
      %v383 = vmul.f32 %v381, 8.0
      %v384 = vmul.f32 %v382, 8.0
      %v385 = vmul.f32 %v383, %v371
      %v386 = vmul.f32 %v384, %v372
      %v387 = vadd.f32 %v379, %v385
      %v388 = vadd.f32 %v380, %v386
      %v389 = vmul.f32 %v326, 4.0
      %v390 = vmul.f32 %v327, 4.0
      %v391 = vmul.f32 %v389, %v340
      %v392 = vmul.f32 %v390, %v341
      %v393 = vadd.f32 %v391, 0.0
      %v394 = vadd.f32 %v392, 0.0
      %v395 = vmul.f32 %v381, 4.0
      %v396 = vmul.f32 %v382, 4.0
      %v397 = vmul.f32 %v395, %v387
      %v398 = vmul.f32 %v396, %v388
      %v399 = vadd.f32 %v393, %v397
      %v400 = vadd.f32 %v394, %v398
      %v402 = vcombine.high %v399, %v399
      %404 = vst [vmem:[#allocation2 + $0x30] sm:$0xf] %v399
      %405 = vst [vmem:[#allocation2 + $0x38] sm:$0xf] %v402
      %406 = vst [vmem:[#allocation2 + $0x40] sm:$0xf] %v400
      %vm407 = vcmp.ge.f32.partialorder %v145, 0.875
      %vm408 = vcmp.ge.f32.partialorder %v146, 0.875
      %vm409 = vcmp.lt.f32.partialorder %v145, 1.0
      %vm410 = vcmp.lt.f32.partialorder %v146, 1.0
      %vm411 = vmand %vm407, %vm409
      %vm412 = vmand %vm408, %vm410
      %v413 = vsel %vm411, 1, 0
      %v414 = vsel %vm412, 1, 0
      %v415 = vcvt.s32.f32 %v413
      %v416 = vcvt.s32.f32 %v414
      %v417 = vsub.f32 %v145, 0.75
      %v418 = vsub.f32 %v146, 0.75
      %v419 = vmul.f32 %v417, 8.0
      %v420 = vmul.f32 %v418, 8.0
      %v421 = vmul.f32 %v419, %v371
      %v422 = vmul.f32 %v420, %v372
      %v423 = vadd.f32 %v421, 0.0
      %v424 = vadd.f32 %v422, 0.0
      %v425 = vsub.f32 1.0, %v145
      %v426 = vsub.f32 1.0, %v146
      %v427 = vmul.f32 %v425, 8.0
      %v428 = vmul.f32 %v426, 8.0
      %v429 = vmul.f32 %v427, %v415
      %v430 = vmul.f32 %v428, %v416
      %v431 = vadd.f32 %v423, %v429
      %v432 = vadd.f32 %v424, %v430
      %v433 = vmul.f32 %v373, 4.0
      %v434 = vmul.f32 %v374, 4.0
      %v435 = vmul.f32 %v433, %v387
      %v436 = vmul.f32 %v434, %v388
      %v437 = vadd.f32 %v435, 0.0
      %v438 = vadd.f32 %v436, 0.0
      %v439 = vmul.f32 %v425, 4.0
      %v440 = vmul.f32 %v426, 4.0
      %v441 = vmul.f32 %v439, %v431
      %v442 = vmul.f32 %v440, %v432
      %v443 = vadd.f32 %v437, %v441
      %v444 = vadd.f32 %v438, %v442
      %v447 = vcombine.low %v443, %v443
      %v448 = vcombine.low %v444, %v444
      %451 = vst [vmem:[#allocation2 + $0x30] sm:$0xf0] %v447
      %452 = vst [vmem:[#allocation2 + $0x38] sm:$0xf0] %v443
      %453 = vst [vmem:[#allocation2 + $0x40] sm:$0xf0] %v448
      %v454 = vld [vmem:[#allocation2] sm:$0xff]
      %v455 = vld [vmem:[#allocation2 + $0x8] sm:$0xff]
      %v456 = vld [vmem:[#allocation2 + $0x10] sm:$0xff]
      %v457 = vld [vmem:[#allocation2 + $0x18] sm:$0xff]
      %v458 = vld [vmem:[#allocation2 + $0x20] sm:$0xff]
      %v459 = vld [vmem:[#allocation2 + $0x28] sm:$0xff]
      %v460 = vld [vmem:[#allocation2 + $0x30] sm:$0xff]
      %v461 = vld [vmem:[#allocation2 + $0x38] sm:$0xff]
      %v462 = vld [vmem:[#allocation2 + $0x40] sm:$0xff]
      %v463 = vpack.c.bf16 %v457, %v454
      %v464 = vpack.c.bf16 %v458, %v455
      %v465 = vpack.c.bf16 %v459, %v456
      %v466 = vpack.c.bf16 %v460, %v460
      %v467 = vpack.c.bf16 %v461, %v461
      %v468 = vpack.c.bf16 %v462, %v462
      %v469 = vld [vmem:[%s1] sm:$0x3]
      %s470 = scalar_lea.vmem %s1, 2
      %v471 = vld [vmem:[%s470] sm:$0x3]
      %478 = vrot.lane.b32.xlu0 %v463, 127
      %v479 = vpop.permute.xlu0 %478
      %480 = vrot.lane.b32.xlu0 %v464, 127
      %v481 = vpop.permute.xlu0 %480
      %482 = vrot.lane.b32.xlu0 %v465, 127
      %v483 = vpop.permute.xlu0 %482
      %484 = vrot.lane.b32.xlu0 %v466, 127
      %v485 = vpop.permute.xlu0 %484
      %486 = vrot.lane.b32.xlu0 %v467, 127
      %v487 = vpop.permute.xlu0 %486
      %488 = vrot.lane.b32.xlu0 %v468, 127
      %v489 = vpop.permute.xlu0 %488
      %vm490 = vcmask 1039360
      %v491 = vsel %vm490, %v479, %v481
      %v492 = vsel %vm490, %v481, %v483
      %v493 = vsel %vm490, %v485, %v487
      %v494 = vsel %vm490, %v487, %v489
      %vm498 = vcmask 195584
      %v500 = vsel %vm498, %v471, 0
      %vm502 = vcmask 1043456
      %v504 = vsel %vm502, %v493, 0
      %v507 = vsel %vm502, %v494, 0
      %v510 = vsel %vm502, %v489, 0
      %512 = vmatprep.subr.bf16.mxu0 %v492
      %513 = vmatpush1.bf16.msra.mxu0 %v491
      %514 = vmatprep.subr.bf16.mxu0 %v507
      %515 = vmatpush1.bf16.msra.mxu0 %v504
      %516 = vmatprep.subr.bf16.mxu0 0
      %517 = vmatpush1.bf16.msra.mxu0 0
      %518 = vmatprep.subr.bf16.mxu0 0
      %519 = vmatpush1.bf16.msra.mxu0 0
      %520 = vmatprep.subr.bf16.mxu0 0
      %521 = vmatpush1.bf16.msra.mxu0 0
      %522 = vmatprep.subr.bf16.mxu0 0
      %523 = vmatpush1.bf16.msra.mxu0 0
      %524 = vmatprep.subr.bf16.mxu0 0
      %525 = vmatpush1.bf16.msra.mxu0 0
      %526 = vmatprep.subr.bf16.mxu0 0
      %527 = vmatpush1.bf16.msra.mxu0 0
      %528 = vmatprep.subr.bf16.mxu0 0
      %529 = vmatpush1.bf16.msra.mxu0 0
      %530 = vmatprep.subr.bf16.mxu0 0
      %531 = vmatpush1.bf16.msra.mxu0 0
      %532 = vmatprep.subr.bf16.mxu0 0
      %533 = vmatpush1.bf16.msra.mxu0 0
      %534 = vmatprep.subr.bf16.mxu0 0
      %535 = vmatpush1.bf16.msra.mxu0 0
      %536 = vmatprep.subr.bf16.mxu0 0
      %537 = vmatpush1.bf16.msra.mxu0 0
      %538 = vmatprep.subr.bf16.mxu0 0
      %539 = vmatpush1.bf16.msra.mxu0 0
      %540 = vmatprep.subr.bf16.mxu0 0
      %541 = vmatpush1.bf16.msra.mxu0 0
      %542 = vmatprep.subr.bf16.mxu0 0
      %543 = vmatpush1.bf16.msra.mxu0 0
      %544 = vmatprep.mubr.bf16.mxu0 0
      %545 = vmatmul.mubr.bf16.gmra.mrb[0].mxu0 %v500
      %v546 = vpop.f32.mrb[0].mxu0
      %v547 = vadd.f32 0.0, %v546
      %v548 = vpop.f32.mrb[0].mxu0
      %v549 = vadd.f32 0.0, %v548
      %v550 = vpop.f32.mrb[0].mxu0
      %v551 = vpop.f32.mrb[0].mxu0
      %552 = vdwg.mxu0
      %553 = vmatprep.subr.bf16.mxu0 0
      %554 = vmatpush1.bf16.msra.mxu0 %v483
      %555 = vmatprep.subr.bf16.mxu0 0
      %556 = vmatpush1.bf16.msra.mxu0 %v510
      %557 = vmatprep.subr.bf16.mxu0 0
      %558 = vmatpush1.bf16.msra.mxu0 0
      %559 = vmatprep.subr.bf16.mxu0 0
      %560 = vmatpush1.bf16.msra.mxu0 0
      %561 = vmatprep.subr.bf16.mxu0 0
      %562 = vmatpush1.bf16.msra.mxu0 0
      %563 = vmatprep.subr.bf16.mxu0 0
      %564 = vmatpush1.bf16.msra.mxu0 0
      %565 = vmatprep.subr.bf16.mxu0 0
      %566 = vmatpush1.bf16.msra.mxu0 0
      %567 = vmatprep.subr.bf16.mxu0 0
      %568 = vmatpush1.bf16.msra.mxu0 0
      %569 = vmatprep.subr.bf16.mxu0 0
      %570 = vmatpush1.bf16.msra.mxu0 0
      %571 = vmatprep.subr.bf16.mxu0 0
      %572 = vmatpush1.bf16.msra.mxu0 0
      %573 = vmatprep.subr.bf16.mxu0 0
      %574 = vmatpush1.bf16.msra.mxu0 0
      %575 = vmatprep.subr.bf16.mxu0 0
      %576 = vmatpush1.bf16.msra.mxu0 0
      %577 = vmatprep.subr.bf16.mxu0 0
      %578 = vmatpush1.bf16.msra.mxu0 0
      %579 = vmatprep.subr.bf16.mxu0 0
      %580 = vmatpush1.bf16.msra.mxu0 0
      %581 = vmatprep.subr.bf16.mxu0 0
      %582 = vmatpush1.bf16.msra.mxu0 0
      %583 = vmatprep.subr.bf16.mxu0 0
      %584 = vmatpush1.bf16.msra.mxu0 0
      %585 = vmatprep.mubr.bf16.mxu0 0
      %586 = vmatmul.mubr.bf16.gmra.mrb[0].mxu0 %v500
      %v587 = vpop.f32.mrb[0].mxu0
      %v588 = vadd.f32 0.0, %v587
      %v589 = vpop.f32.mrb[0].mxu0
      %v590 = vpop.f32.mrb[0].mxu0
      %v591 = vpop.f32.mrb[0].mxu0
      %592 = vdwg.mxu0
      %v594 = vsel %vm498, %v469, 0
      %v597 = vsel %vm502, %v466, 0
      %v600 = vsel %vm502, %v467, 0
      %v603 = vsel %vm502, %v468, 0
      %605 = vmatprep.subr.bf16.mxu0 %v464
      %606 = vmatpush1.bf16.msra.mxu0 %v463
      %607 = vmatprep.subr.bf16.mxu0 %v600
      %608 = vmatpush1.bf16.msra.mxu0 %v597
      %609 = vmatprep.subr.bf16.mxu0 0
      %610 = vmatpush1.bf16.msra.mxu0 0
      %611 = vmatprep.subr.bf16.mxu0 0
      %612 = vmatpush1.bf16.msra.mxu0 0
      %613 = vmatprep.subr.bf16.mxu0 0
      %614 = vmatpush1.bf16.msra.mxu0 0
      %615 = vmatprep.subr.bf16.mxu0 0
      %616 = vmatpush1.bf16.msra.mxu0 0
      %617 = vmatprep.subr.bf16.mxu0 0
      %618 = vmatpush1.bf16.msra.mxu0 0
      %619 = vmatprep.subr.bf16.mxu0 0
      %620 = vmatpush1.bf16.msra.mxu0 0
      %621 = vmatprep.subr.bf16.mxu0 0
      %622 = vmatpush1.bf16.msra.mxu0 0
      %623 = vmatprep.subr.bf16.mxu0 0
      %624 = vmatpush1.bf16.msra.mxu0 0
      %625 = vmatprep.subr.bf16.mxu0 0
      %626 = vmatpush1.bf16.msra.mxu0 0
      %627 = vmatprep.subr.bf16.mxu0 0
      %628 = vmatpush1.bf16.msra.mxu0 0
      %629 = vmatprep.subr.bf16.mxu0 0
      %630 = vmatpush1.bf16.msra.mxu0 0
      %631 = vmatprep.subr.bf16.mxu0 0
      %632 = vmatpush1.bf16.msra.mxu0 0
      %633 = vmatprep.subr.bf16.mxu0 0
      %634 = vmatpush1.bf16.msra.mxu0 0
      %635 = vmatprep.subr.bf16.mxu0 0
      %636 = vmatpush1.bf16.msra.mxu0 0
      %637 = vmatprep.mubr.bf16.mxu0 0
      %638 = vmatmul.mubr.bf16.gmra.mrb[0].mxu0 %v594
      %v639 = vpop.f32.mrb[0].mxu0
      %v640 = vadd.f32 %v547, %v639
      %v641 = vpop.f32.mrb[0].mxu0
      %v642 = vadd.f32 %v549, %v641
      %v643 = vpop.f32.mrb[0].mxu0
      %v644 = vpop.f32.mrb[0].mxu0
      %645 = vdwg.mxu0
      %646 = vmatprep.subr.bf16.mxu0 0
      %647 = vmatpush1.bf16.msra.mxu0 %v465
      %648 = vmatprep.subr.bf16.mxu0 0
      %649 = vmatpush1.bf16.msra.mxu0 %v603
      %650 = vmatprep.subr.bf16.mxu0 0
      %651 = vmatpush1.bf16.msra.mxu0 0
      %652 = vmatprep.subr.bf16.mxu0 0
      %653 = vmatpush1.bf16.msra.mxu0 0
      %654 = vmatprep.subr.bf16.mxu0 0
      %655 = vmatpush1.bf16.msra.mxu0 0
      %656 = vmatprep.subr.bf16.mxu0 0
      %657 = vmatpush1.bf16.msra.mxu0 0
      %658 = vmatprep.subr.bf16.mxu0 0
      %659 = vmatpush1.bf16.msra.mxu0 0
      %660 = vmatprep.subr.bf16.mxu0 0
      %661 = vmatpush1.bf16.msra.mxu0 0
      %662 = vmatprep.subr.bf16.mxu0 0
      %663 = vmatpush1.bf16.msra.mxu0 0
      %664 = vmatprep.subr.bf16.mxu0 0
      %665 = vmatpush1.bf16.msra.mxu0 0
      %666 = vmatprep.subr.bf16.mxu0 0
      %667 = vmatpush1.bf16.msra.mxu0 0
      %668 = vmatprep.subr.bf16.mxu0 0
      %669 = vmatpush1.bf16.msra.mxu0 0
      %670 = vmatprep.subr.bf16.mxu0 0
      %671 = vmatpush1.bf16.msra.mxu0 0
      %672 = vmatprep.subr.bf16.mxu0 0
      %673 = vmatpush1.bf16.msra.mxu0 0
      %674 = vmatprep.subr.bf16.mxu0 0
      %675 = vmatpush1.bf16.msra.mxu0 0
      %676 = vmatprep.subr.bf16.mxu0 0
      %677 = vmatpush1.bf16.msra.mxu0 0
      %678 = vmatprep.mubr.bf16.mxu0 0
      %679 = vmatmul.mubr.bf16.gmra.mrb[0].mxu0 %v594
      %v680 = vpop.f32.mrb[0].mxu0
      %v681 = vadd.f32 %v588, %v680
      %v682 = vpop.f32.mrb[0].mxu0
      %v683 = vpop.f32.mrb[0].mxu0
      %v684 = vpop.f32.mrb[0].mxu0
      %685 = vdwg.mxu0
      %s686 = scalar_lea.vmem %s1, 4
      %v687 = vld [vmem:[%s686] sm:$0x3]
      %688 = vrot.lane.b32.xlu0 %v463, 126
      %v689 = vpop.permute.xlu0 %688
      %690 = vrot.lane.b32.xlu0 %v464, 126
      %v691 = vpop.permute.xlu0 %690
      %692 = vrot.lane.b32.xlu0 %v465, 126
      %v693 = vpop.permute.xlu0 %692
      %694 = vrot.lane.b32.xlu0 %v466, 126
      %v695 = vpop.permute.xlu0 %694
      %696 = vrot.lane.b32.xlu0 %v467, 126
      %v697 = vpop.permute.xlu0 %696
      %698 = vrot.lane.b32.xlu0 %v468, 126
      %v699 = vpop.permute.xlu0 %698
      %vm700 = vcmask 1031168
      %v701 = vsel %vm700, %v689, %v691
      %v702 = vsel %vm700, %v691, %v693
      %v703 = vsel %vm700, %v695, %v697
      %v704 = vsel %vm700, %v697, %v699
      %v709 = vsel %vm498, %v687, 0
      %v712 = vsel %vm502, %v703, 0
      %v715 = vsel %vm502, %v704, 0
      %v718 = vsel %vm502, %v699, 0
      %720 = vmatprep.subr.bf16.mxu0 %v702
      %721 = vmatpush1.bf16.msra.mxu0 %v701
      %722 = vmatprep.subr.bf16.mxu0 %v715
      %723 = vmatpush1.bf16.msra.mxu0 %v712
      %724 = vmatprep.subr.bf16.mxu0 0
      %725 = vmatpush1.bf16.msra.mxu0 0
      %726 = vmatprep.subr.bf16.mxu0 0
      %727 = vmatpush1.bf16.msra.mxu0 0
      %728 = vmatprep.subr.bf16.mxu0 0
      %729 = vmatpush1.bf16.msra.mxu0 0
      %730 = vmatprep.subr.bf16.mxu0 0
      %731 = vmatpush1.bf16.msra.mxu0 0
      %732 = vmatprep.subr.bf16.mxu0 0
      %733 = vmatpush1.bf16.msra.mxu0 0
      %734 = vmatprep.subr.bf16.mxu0 0
      %735 = vmatpush1.bf16.msra.mxu0 0
      %736 = vmatprep.subr.bf16.mxu0 0
      %737 = vmatpush1.bf16.msra.mxu0 0
      %738 = vmatprep.subr.bf16.mxu0 0
      %739 = vmatpush1.bf16.msra.mxu0 0
      %740 = vmatprep.subr.bf16.mxu0 0
      %741 = vmatpush1.bf16.msra.mxu0 0
      %742 = vmatprep.subr.bf16.mxu0 0
      %743 = vmatpush1.bf16.msra.mxu0 0
      %744 = vmatprep.subr.bf16.mxu0 0
      %745 = vmatpush1.bf16.msra.mxu0 0
      %746 = vmatprep.subr.bf16.mxu0 0
      %747 = vmatpush1.bf16.msra.mxu0 0
      %748 = vmatprep.subr.bf16.mxu0 0
      %749 = vmatpush1.bf16.msra.mxu0 0
      %750 = vmatprep.subr.bf16.mxu0 0
      %751 = vmatpush1.bf16.msra.mxu0 0
      %752 = vmatprep.mubr.bf16.mxu0 0
      %753 = vmatmul.mubr.bf16.gmra.mrb[0].mxu0 %v709
      %v754 = vpop.f32.mrb[0].mxu0
      %v755 = vadd.f32 0.0, %v754
      %v756 = vpop.f32.mrb[0].mxu0
      %v757 = vadd.f32 0.0, %v756
      %v758 = vpop.f32.mrb[0].mxu0
      %v759 = vpop.f32.mrb[0].mxu0
      %760 = vdwg.mxu0
      %761 = vmatprep.subr.bf16.mxu0 0
      %762 = vmatpush1.bf16.msra.mxu0 %v693
      %763 = vmatprep.subr.bf16.mxu0 0
      %764 = vmatpush1.bf16.msra.mxu0 %v718
      %765 = vmatprep.subr.bf16.mxu0 0
      %766 = vmatpush1.bf16.msra.mxu0 0
      %767 = vmatprep.subr.bf16.mxu0 0
      %768 = vmatpush1.bf16.msra.mxu0 0
      %769 = vmatprep.subr.bf16.mxu0 0
      %770 = vmatpush1.bf16.msra.mxu0 0
      %771 = vmatprep.subr.bf16.mxu0 0
      %772 = vmatpush1.bf16.msra.mxu0 0
      %773 = vmatprep.subr.bf16.mxu0 0
      %774 = vmatpush1.bf16.msra.mxu0 0
      %775 = vmatprep.subr.bf16.mxu0 0
      %776 = vmatpush1.bf16.msra.mxu0 0
      %777 = vmatprep.subr.bf16.mxu0 0
      %778 = vmatpush1.bf16.msra.mxu0 0
      %779 = vmatprep.subr.bf16.mxu0 0
      %780 = vmatpush1.bf16.msra.mxu0 0
      %781 = vmatprep.subr.bf16.mxu0 0
      %782 = vmatpush1.bf16.msra.mxu0 0
      %783 = vmatprep.subr.bf16.mxu0 0
      %784 = vmatpush1.bf16.msra.mxu0 0
      %785 = vmatprep.subr.bf16.mxu0 0
      %786 = vmatpush1.bf16.msra.mxu0 0
      %787 = vmatprep.subr.bf16.mxu0 0
      %788 = vmatpush1.bf16.msra.mxu0 0
      %789 = vmatprep.subr.bf16.mxu0 0
      %790 = vmatpush1.bf16.msra.mxu0 0
      %791 = vmatprep.subr.bf16.mxu0 0
      %792 = vmatpush1.bf16.msra.mxu0 0
      %793 = vmatprep.mubr.bf16.mxu0 0
      %794 = vmatmul.mubr.bf16.gmra.mrb[0].mxu0 %v709
      %v795 = vpop.f32.mrb[0].mxu0
      %v796 = vadd.f32 0.0, %v795
      %v797 = vpop.f32.mrb[0].mxu0
      %v798 = vpop.f32.mrb[0].mxu0
      %v799 = vpop.f32.mrb[0].mxu0
      %800 = vdwg.mxu0
      %v801 = vadd.f32 %v640, %v755
      %v802 = vadd.f32 %v642, %v757
      %v803 = vadd.f32 %v681, %v796
      %s804 = scalar_lea.vmem %s1, 6
      %v805 = vld [vmem:[%s804] sm:$0x3]
      %806 = vrot.lane.b32.xlu0 %v463, 110
      %v807 = vpop.permute.xlu0 %806
      %808 = vrot.lane.b32.xlu0 %v464, 110
      %v809 = vpop.permute.xlu0 %808
      %810 = vrot.lane.b32.xlu0 %v465, 110
      %v811 = vpop.permute.xlu0 %810
      %812 = vrot.lane.b32.xlu0 %v466, 110
      %v813 = vpop.permute.xlu0 %812
      %814 = vrot.lane.b32.xlu0 %v467, 110
      %v815 = vpop.permute.xlu0 %814
      %816 = vrot.lane.b32.xlu0 %v468, 110
      %v817 = vpop.permute.xlu0 %816
      %vm818 = vcmask 900096
      %v819 = vsel %vm818, %v807, %v809
      %v820 = vsel %vm818, %v809, %v811
      %v821 = vsel %vm818, %v813, %v815
      %v822 = vsel %vm818, %v815, %v817
      %v827 = vsel %vm498, %v805, 0
      %v830 = vsel %vm502, %v821, 0
      %v833 = vsel %vm502, %v822, 0
      %v836 = vsel %vm502, %v817, 0
      %838 = vmatprep.subr.bf16.mxu0 %v820
      %839 = vmatpush1.bf16.msra.mxu0 %v819
      %840 = vmatprep.subr.bf16.mxu0 %v833
      %841 = vmatpush1.bf16.msra.mxu0 %v830
      %842 = vmatprep.subr.bf16.mxu0 0
      %843 = vmatpush1.bf16.msra.mxu0 0
      %844 = vmatprep.subr.bf16.mxu0 0
      %845 = vmatpush1.bf16.msra.mxu0 0
      %846 = vmatprep.subr.bf16.mxu0 0
      %847 = vmatpush1.bf16.msra.mxu0 0
      %848 = vmatprep.subr.bf16.mxu0 0
      %849 = vmatpush1.bf16.msra.mxu0 0
      %850 = vmatprep.subr.bf16.mxu0 0
      %851 = vmatpush1.bf16.msra.mxu0 0
      %852 = vmatprep.subr.bf16.mxu0 0
      %853 = vmatpush1.bf16.msra.mxu0 0
      %854 = vmatprep.subr.bf16.mxu0 0
      %855 = vmatpush1.bf16.msra.mxu0 0
      %856 = vmatprep.subr.bf16.mxu0 0
      %857 = vmatpush1.bf16.msra.mxu0 0
      %858 = vmatprep.subr.bf16.mxu0 0
      %859 = vmatpush1.bf16.msra.mxu0 0
      %860 = vmatprep.subr.bf16.mxu0 0
      %861 = vmatpush1.bf16.msra.mxu0 0
      %862 = vmatprep.subr.bf16.mxu0 0
      %863 = vmatpush1.bf16.msra.mxu0 0
      %864 = vmatprep.subr.bf16.mxu0 0
      %865 = vmatpush1.bf16.msra.mxu0 0
      %866 = vmatprep.subr.bf16.mxu0 0
      %867 = vmatpush1.bf16.msra.mxu0 0
      %868 = vmatprep.subr.bf16.mxu0 0
      %869 = vmatpush1.bf16.msra.mxu0 0
      %870 = vmatprep.mubr.bf16.mxu0 0
      %871 = vmatmul.mubr.bf16.gmra.mrb[0].mxu0 %v827
      %v872 = vpop.f32.mrb[0].mxu0
      %v873 = vadd.f32 0.0, %v872
      %v874 = vpop.f32.mrb[0].mxu0
      %v875 = vadd.f32 0.0, %v874
      %v876 = vpop.f32.mrb[0].mxu0
      %v877 = vpop.f32.mrb[0].mxu0
      %878 = vdwg.mxu0
      %879 = vmatprep.subr.bf16.mxu0 0
      %880 = vmatpush1.bf16.msra.mxu0 %v811
      %881 = vmatprep.subr.bf16.mxu0 0
      %882 = vmatpush1.bf16.msra.mxu0 %v836
      %883 = vmatprep.subr.bf16.mxu0 0
      %884 = vmatpush1.bf16.msra.mxu0 0
      %885 = vmatprep.subr.bf16.mxu0 0
      %886 = vmatpush1.bf16.msra.mxu0 0
      %887 = vmatprep.subr.bf16.mxu0 0
      %888 = vmatpush1.bf16.msra.mxu0 0
      %889 = vmatprep.subr.bf16.mxu0 0
      %890 = vmatpush1.bf16.msra.mxu0 0
      %891 = vmatprep.subr.bf16.mxu0 0
      %892 = vmatpush1.bf16.msra.mxu0 0
      %893 = vmatprep.subr.bf16.mxu0 0
      %894 = vmatpush1.bf16.msra.mxu0 0
      %895 = vmatprep.subr.bf16.mxu0 0
      %896 = vmatpush1.bf16.msra.mxu0 0
      %897 = vmatprep.subr.bf16.mxu0 0
      %898 = vmatpush1.bf16.msra.mxu0 0
      %899 = vmatprep.subr.bf16.mxu0 0
      %900 = vmatpush1.bf16.msra.mxu0 0
      %901 = vmatprep.subr.bf16.mxu0 0
      %902 = vmatpush1.bf16.msra.mxu0 0
      %903 = vmatprep.subr.bf16.mxu0 0
      %904 = vmatpush1.bf16.msra.mxu0 0
      %905 = vmatprep.subr.bf16.mxu0 0
      %906 = vmatpush1.bf16.msra.mxu0 0
      %907 = vmatprep.subr.bf16.mxu0 0
      %908 = vmatpush1.bf16.msra.mxu0 0
      %909 = vmatprep.subr.bf16.mxu0 0
      %910 = vmatpush1.bf16.msra.mxu0 0
      %911 = vmatprep.mubr.bf16.mxu0 0
      %912 = vmatmul.mubr.bf16.gmra.mrb[0].mxu0 %v827
      %v913 = vpop.f32.mrb[0].mxu0
      %v914 = vadd.f32 0.0, %v913
      %v915 = vpop.f32.mrb[0].mxu0
      %v916 = vpop.f32.mrb[0].mxu0
      %v917 = vpop.f32.mrb[0].mxu0
      %918 = vdwg.mxu0
      %v919 = vadd.f32 %v801, %v873
      %v920 = vadd.f32 %v802, %v875
      %v921 = vadd.f32 %v803, %v914
      %s922 = scalar_lea.vmem %s1, 8
      %v923 = vld [vmem:[%s922] sm:$0x3]
      %924 = vrot.lane.b32.xlu0 %v463, 109
      %v925 = vpop.permute.xlu0 %924
      %926 = vrot.lane.b32.xlu0 %v464, 109
      %v927 = vpop.permute.xlu0 %926
      %928 = vrot.lane.b32.xlu0 %v465, 109
      %v929 = vpop.permute.xlu0 %928
      %930 = vrot.lane.b32.xlu0 %v466, 109
      %v931 = vpop.permute.xlu0 %930
      %932 = vrot.lane.b32.xlu0 %v467, 109
      %v933 = vpop.permute.xlu0 %932
      %934 = vrot.lane.b32.xlu0 %v468, 109
      %v935 = vpop.permute.xlu0 %934
      %vm936 = vcmask 891904
      %v937 = vsel %vm936, %v925, %v927
      %v938 = vsel %vm936, %v927, %v929
      %v939 = vsel %vm936, %v931, %v933
      %v940 = vsel %vm936, %v933, %v935
      %v945 = vsel %vm498, %v923, 0
      %v948 = vsel %vm502, %v939, 0
      %v951 = vsel %vm502, %v940, 0
      %v954 = vsel %vm502, %v935, 0
      %956 = vmatprep.subr.bf16.mxu0 %v938
      %957 = vmatpush1.bf16.msra.mxu0 %v937
      %958 = vmatprep.subr.bf16.mxu0 %v951
      %959 = vmatpush1.bf16.msra.mxu0 %v948
      %960 = vmatprep.subr.bf16.mxu0 0
      %961 = vmatpush1.bf16.msra.mxu0 0
      %962 = vmatprep.subr.bf16.mxu0 0
      %963 = vmatpush1.bf16.msra.mxu0 0
      %964 = vmatprep.subr.bf16.mxu0 0
      %965 = vmatpush1.bf16.msra.mxu0 0
      %966 = vmatprep.subr.bf16.mxu0 0
      %967 = vmatpush1.bf16.msra.mxu0 0
      %968 = vmatprep.subr.bf16.mxu0 0
      %969 = vmatpush1.bf16.msra.mxu0 0
      %970 = vmatprep.subr.bf16.mxu0 0
      %971 = vmatpush1.bf16.msra.mxu0 0
      %972 = vmatprep.subr.bf16.mxu0 0
      %973 = vmatpush1.bf16.msra.mxu0 0
      %974 = vmatprep.subr.bf16.mxu0 0
      %975 = vmatpush1.bf16.msra.mxu0 0
      %976 = vmatprep.subr.bf16.mxu0 0
      %977 = vmatpush1.bf16.msra.mxu0 0
      %978 = vmatprep.subr.bf16.mxu0 0
      %979 = vmatpush1.bf16.msra.mxu0 0
      %980 = vmatprep.subr.bf16.mxu0 0
      %981 = vmatpush1.bf16.msra.mxu0 0
      %982 = vmatprep.subr.bf16.mxu0 0
      %983 = vmatpush1.bf16.msra.mxu0 0
      %984 = vmatprep.subr.bf16.mxu0 0
      %985 = vmatpush1.bf16.msra.mxu0 0
      %986 = vmatprep.subr.bf16.mxu0 0
      %987 = vmatpush1.bf16.msra.mxu0 0
      %988 = vmatprep.mubr.bf16.mxu0 0
      %989 = vmatmul.mubr.bf16.gmra.mrb[0].mxu0 %v945
      %v990 = vpop.f32.mrb[0].mxu0
      %v991 = vadd.f32 0.0, %v990
      %v992 = vpop.f32.mrb[0].mxu0
      %v993 = vadd.f32 0.0, %v992
      %v994 = vpop.f32.mrb[0].mxu0
      %v995 = vpop.f32.mrb[0].mxu0
      %996 = vdwg.mxu0
      %997 = vmatprep.subr.bf16.mxu0 0
      %998 = vmatpush1.bf16.msra.mxu0 %v929
      %999 = vmatprep.subr.bf16.mxu0 0
      %1000 = vmatpush1.bf16.msra.mxu0 %v954
      %1001 = vmatprep.subr.bf16.mxu0 0
      %1002 = vmatpush1.bf16.msra.mxu0 0
      %1003 = vmatprep.subr.bf16.mxu0 0
      %1004 = vmatpush1.bf16.msra.mxu0 0
      %1005 = vmatprep.subr.bf16.mxu0 0
      %1006 = vmatpush1.bf16.msra.mxu0 0
      %1007 = vmatprep.subr.bf16.mxu0 0
      %1008 = vmatpush1.bf16.msra.mxu0 0
      %1009 = vmatprep.subr.bf16.mxu0 0
      %1010 = vmatpush1.bf16.msra.mxu0 0
      %1011 = vmatprep.subr.bf16.mxu0 0
      %1012 = vmatpush1.bf16.msra.mxu0 0
      %1013 = vmatprep.subr.bf16.mxu0 0
      %1014 = vmatpush1.bf16.msra.mxu0 0
      %1015 = vmatprep.subr.bf16.mxu0 0
      %1016 = vmatpush1.bf16.msra.mxu0 0
      %1017 = vmatprep.subr.bf16.mxu0 0
      %1018 = vmatpush1.bf16.msra.mxu0 0
      %1019 = vmatprep.subr.bf16.mxu0 0
      %1020 = vmatpush1.bf16.msra.mxu0 0
      %1021 = vmatprep.subr.bf16.mxu0 0
      %1022 = vmatpush1.bf16.msra.mxu0 0
      %1023 = vmatprep.subr.bf16.mxu0 0
      %1024 = vmatpush1.bf16.msra.mxu0 0
      %1025 = vmatprep.subr.bf16.mxu0 0
      %1026 = vmatpush1.bf16.msra.mxu0 0
      %1027 = vmatprep.subr.bf16.mxu0 0
      %1028 = vmatpush1.bf16.msra.mxu0 0
      %1029 = vmatprep.mubr.bf16.mxu0 0
      %1030 = vmatmul.mubr.bf16.gmra.mrb[0].mxu0 %v945
      %v1031 = vpop.f32.mrb[0].mxu0
      %v1032 = vadd.f32 0.0, %v1031
      %v1033 = vpop.f32.mrb[0].mxu0
      %v1034 = vpop.f32.mrb[0].mxu0
      %v1035 = vpop.f32.mrb[0].mxu0
      %1036 = vdwg.mxu0
      %v1037 = vadd.f32 %v919, %v991
      %v1038 = vadd.f32 %v920, %v993
      %v1039 = vadd.f32 %v921, %v1032
      %s1040 = scalar_lea.vmem %s1, 10
      %v1041 = vld [vmem:[%s1040] sm:$0x3]
      %1042 = vrot.lane.b32.xlu0 %v463, 108
      %v1043 = vpop.permute.xlu0 %1042
      %1044 = vrot.lane.b32.xlu0 %v464, 108
      %v1045 = vpop.permute.xlu0 %1044
      %1046 = vrot.lane.b32.xlu0 %v465, 108
      %v1047 = vpop.permute.xlu0 %1046
      %1048 = vrot.lane.b32.xlu0 %v466, 108
      %v1049 = vpop.permute.xlu0 %1048
      %1050 = vrot.lane.b32.xlu0 %v467, 108
      %v1051 = vpop.permute.xlu0 %1050
      %1052 = vrot.lane.b32.xlu0 %v468, 108
      %v1053 = vpop.permute.xlu0 %1052
      %vm1054 = vcmask 883712
      %v1055 = vsel %vm1054, %v1043, %v1045
      %v1056 = vsel %vm1054, %v1045, %v1047
      %v1057 = vsel %vm1054, %v1049, %v1051
      %v1058 = vsel %vm1054, %v1051, %v1053
      %v1063 = vsel %vm498, %v1041, 0
      %v1066 = vsel %vm502, %v1057, 0
      %v1069 = vsel %vm502, %v1058, 0
      %v1072 = vsel %vm502, %v1053, 0
      %1074 = vmatprep.subr.bf16.mxu0 %v1056
      %1075 = vmatpush1.bf16.msra.mxu0 %v1055
      %1076 = vmatprep.subr.bf16.mxu0 %v1069
      %1077 = vmatpush1.bf16.msra.mxu0 %v1066
      %1078 = vmatprep.subr.bf16.mxu0 0
      %1079 = vmatpush1.bf16.msra.mxu0 0
      %1080 = vmatprep.subr.bf16.mxu0 0
      %1081 = vmatpush1.bf16.msra.mxu0 0
      %1082 = vmatprep.subr.bf16.mxu0 0
      %1083 = vmatpush1.bf16.msra.mxu0 0
      %1084 = vmatprep.subr.bf16.mxu0 0
      %1085 = vmatpush1.bf16.msra.mxu0 0
      %1086 = vmatprep.subr.bf16.mxu0 0
      %1087 = vmatpush1.bf16.msra.mxu0 0
      %1088 = vmatprep.subr.bf16.mxu0 0
      %1089 = vmatpush1.bf16.msra.mxu0 0
      %1090 = vmatprep.subr.bf16.mxu0 0
      %1091 = vmatpush1.bf16.msra.mxu0 0
      %1092 = vmatprep.subr.bf16.mxu0 0
      %1093 = vmatpush1.bf16.msra.mxu0 0
      %1094 = vmatprep.subr.bf16.mxu0 0
      %1095 = vmatpush1.bf16.msra.mxu0 0
      %1096 = vmatprep.subr.bf16.mxu0 0
      %1097 = vmatpush1.bf16.msra.mxu0 0
      %1098 = vmatprep.subr.bf16.mxu0 0
      %1099 = vmatpush1.bf16.msra.mxu0 0
      %1100 = vmatprep.subr.bf16.mxu0 0
      %1101 = vmatpush1.bf16.msra.mxu0 0
      %1102 = vmatprep.subr.bf16.mxu0 0
      %1103 = vmatpush1.bf16.msra.mxu0 0
      %1104 = vmatprep.subr.bf16.mxu0 0
      %1105 = vmatpush1.bf16.msra.mxu0 0
      %1106 = vmatprep.mubr.bf16.mxu0 0
      %1107 = vmatmul.mubr.bf16.gmra.mrb[0].mxu0 %v1063
      %v1108 = vpop.f32.mrb[0].mxu0
      %v1109 = vadd.f32 0.0, %v1108
      %v1110 = vpop.f32.mrb[0].mxu0
      %v1111 = vadd.f32 0.0, %v1110
      %v1112 = vpop.f32.mrb[0].mxu0
      %v1113 = vpop.f32.mrb[0].mxu0
      %1114 = vdwg.mxu0
      %1115 = vmatprep.subr.bf16.mxu0 0
      %1116 = vmatpush1.bf16.msra.mxu0 %v1047
      %1117 = vmatprep.subr.bf16.mxu0 0
      %1118 = vmatpush1.bf16.msra.mxu0 %v1072
      %1119 = vmatprep.subr.bf16.mxu0 0
      %1120 = vmatpush1.bf16.msra.mxu0 0
      %1121 = vmatprep.subr.bf16.mxu0 0
      %1122 = vmatpush1.bf16.msra.mxu0 0
      %1123 = vmatprep.subr.bf16.mxu0 0
      %1124 = vmatpush1.bf16.msra.mxu0 0
      %1125 = vmatprep.subr.bf16.mxu0 0
      %1126 = vmatpush1.bf16.msra.mxu0 0
      %1127 = vmatprep.subr.bf16.mxu0 0
      %1128 = vmatpush1.bf16.msra.mxu0 0
      %1129 = vmatprep.subr.bf16.mxu0 0
      %1130 = vmatpush1.bf16.msra.mxu0 0
      %1131 = vmatprep.subr.bf16.mxu0 0
      %1132 = vmatpush1.bf16.msra.mxu0 0
      %1133 = vmatprep.subr.bf16.mxu0 0
      %1134 = vmatpush1.bf16.msra.mxu0 0
      %1135 = vmatprep.subr.bf16.mxu0 0
      %1136 = vmatpush1.bf16.msra.mxu0 0
      %1137 = vmatprep.subr.bf16.mxu0 0
      %1138 = vmatpush1.bf16.msra.mxu0 0
      %1139 = vmatprep.subr.bf16.mxu0 0
      %1140 = vmatpush1.bf16.msra.mxu0 0
      %1141 = vmatprep.subr.bf16.mxu0 0
      %1142 = vmatpush1.bf16.msra.mxu0 0
      %1143 = vmatprep.subr.bf16.mxu0 0
      %1144 = vmatpush1.bf16.msra.mxu0 0
      %1145 = vmatprep.subr.bf16.mxu0 0
      %1146 = vmatpush1.bf16.msra.mxu0 0
      %1147 = vmatprep.mubr.bf16.mxu0 0
      %1148 = vmatmul.mubr.bf16.gmra.mrb[0].mxu0 %v1063
      %v1149 = vpop.f32.mrb[0].mxu0
      %v1150 = vadd.f32 0.0, %v1149
      %v1151 = vpop.f32.mrb[0].mxu0
      %v1152 = vpop.f32.mrb[0].mxu0
      %v1153 = vpop.f32.mrb[0].mxu0
      %1154 = vdwg.mxu0
      %v1155 = vadd.f32 %v1037, %v1109
      %v1156 = vadd.f32 %v1038, %v1111
      %v1157 = vadd.f32 %v1039, %v1150
      %s1158 = scalar_lea.vmem %s1, 12
      %v1159 = vld [vmem:[%s1158] sm:$0x3]
      %1160 = vrot.lane.b32.xlu0 %v463, 92
      %v1161 = vpop.permute.xlu0 %1160
      %1162 = vrot.lane.b32.xlu0 %v464, 92
      %v1163 = vpop.permute.xlu0 %1162
      %1164 = vrot.lane.b32.xlu0 %v465, 92
      %v1165 = vpop.permute.xlu0 %1164
      %1166 = vrot.lane.b32.xlu0 %v466, 92
      %v1167 = vpop.permute.xlu0 %1166
      %1168 = vrot.lane.b32.xlu0 %v467, 92
      %v1169 = vpop.permute.xlu0 %1168
      %1170 = vrot.lane.b32.xlu0 %v468, 92
      %v1171 = vpop.permute.xlu0 %1170
      %vm1172 = vcmask 752640
      %v1173 = vsel %vm1172, %v1161, %v1163
      %v1174 = vsel %vm1172, %v1163, %v1165
      %v1175 = vsel %vm1172, %v1167, %v1169
      %v1176 = vsel %vm1172, %v1169, %v1171
      %v1181 = vsel %vm498, %v1159, 0
      %v1184 = vsel %vm502, %v1175, 0
      %v1187 = vsel %vm502, %v1176, 0
      %v1190 = vsel %vm502, %v1171, 0
      %1192 = vmatprep.subr.bf16.mxu0 %v1174
      %1193 = vmatpush1.bf16.msra.mxu0 %v1173
      %1194 = vmatprep.subr.bf16.mxu0 %v1187
      %1195 = vmatpush1.bf16.msra.mxu0 %v1184
      %1196 = vmatprep.subr.bf16.mxu0 0
      %1197 = vmatpush1.bf16.msra.mxu0 0
      %1198 = vmatprep.subr.bf16.mxu0 0
      %1199 = vmatpush1.bf16.msra.mxu0 0
      %1200 = vmatprep.subr.bf16.mxu0 0
      %1201 = vmatpush1.bf16.msra.mxu0 0
      %1202 = vmatprep.subr.bf16.mxu0 0
      %1203 = vmatpush1.bf16.msra.mxu0 0
      %1204 = vmatprep.subr.bf16.mxu0 0
      %1205 = vmatpush1.bf16.msra.mxu0 0
      %1206 = vmatprep.subr.bf16.mxu0 0
      %1207 = vmatpush1.bf16.msra.mxu0 0
      %1208 = vmatprep.subr.bf16.mxu0 0
      %1209 = vmatpush1.bf16.msra.mxu0 0
      %1210 = vmatprep.subr.bf16.mxu0 0
      %1211 = vmatpush1.bf16.msra.mxu0 0
      %1212 = vmatprep.subr.bf16.mxu0 0
      %1213 = vmatpush1.bf16.msra.mxu0 0
      %1214 = vmatprep.subr.bf16.mxu0 0
      %1215 = vmatpush1.bf16.msra.mxu0 0
      %1216 = vmatprep.subr.bf16.mxu0 0
      %1217 = vmatpush1.bf16.msra.mxu0 0
      %1218 = vmatprep.subr.bf16.mxu0 0
      %1219 = vmatpush1.bf16.msra.mxu0 0
      %1220 = vmatprep.subr.bf16.mxu0 0
      %1221 = vmatpush1.bf16.msra.mxu0 0
      %1222 = vmatprep.subr.bf16.mxu0 0
      %1223 = vmatpush1.bf16.msra.mxu0 0
      %1224 = vmatprep.mubr.bf16.mxu0 0
      %1225 = vmatmul.mubr.bf16.gmra.mrb[0].mxu0 %v1181
      %v1226 = vpop.f32.mrb[0].mxu0
      %v1227 = vadd.f32 0.0, %v1226
      %v1228 = vpop.f32.mrb[0].mxu0
      %v1229 = vadd.f32 0.0, %v1228
      %v1230 = vpop.f32.mrb[0].mxu0
      %v1231 = vpop.f32.mrb[0].mxu0
      %1232 = vdwg.mxu0
      %1233 = vmatprep.subr.bf16.mxu0 0
      %1234 = vmatpush1.bf16.msra.mxu0 %v1165
      %1235 = vmatprep.subr.bf16.mxu0 0
      %1236 = vmatpush1.bf16.msra.mxu0 %v1190
      %1237 = vmatprep.subr.bf16.mxu0 0
      %1238 = vmatpush1.bf16.msra.mxu0 0
      %1239 = vmatprep.subr.bf16.mxu0 0
      %1240 = vmatpush1.bf16.msra.mxu0 0
      %1241 = vmatprep.subr.bf16.mxu0 0
      %1242 = vmatpush1.bf16.msra.mxu0 0
      %1243 = vmatprep.subr.bf16.mxu0 0
      %1244 = vmatpush1.bf16.msra.mxu0 0
      %1245 = vmatprep.subr.bf16.mxu0 0
      %1246 = vmatpush1.bf16.msra.mxu0 0
      %1247 = vmatprep.subr.bf16.mxu0 0
      %1248 = vmatpush1.bf16.msra.mxu0 0
      %1249 = vmatprep.subr.bf16.mxu0 0
      %1250 = vmatpush1.bf16.msra.mxu0 0
      %1251 = vmatprep.subr.bf16.mxu0 0
      %1252 = vmatpush1.bf16.msra.mxu0 0
      %1253 = vmatprep.subr.bf16.mxu0 0
      %1254 = vmatpush1.bf16.msra.mxu0 0
      %1255 = vmatprep.subr.bf16.mxu0 0
      %1256 = vmatpush1.bf16.msra.mxu0 0
      %1257 = vmatprep.subr.bf16.mxu0 0
      %1258 = vmatpush1.bf16.msra.mxu0 0
      %1259 = vmatprep.subr.bf16.mxu0 0
      %1260 = vmatpush1.bf16.msra.mxu0 0
      %1261 = vmatprep.subr.bf16.mxu0 0
      %1262 = vmatpush1.bf16.msra.mxu0 0
      %1263 = vmatprep.subr.bf16.mxu0 0
      %1264 = vmatpush1.bf16.msra.mxu0 0
      %1265 = vmatprep.mubr.bf16.mxu0 0
      %1266 = vmatmul.mubr.bf16.gmra.mrb[0].mxu0 %v1181
      %v1267 = vpop.f32.mrb[0].mxu0
      %v1268 = vadd.f32 0.0, %v1267
      %v1269 = vpop.f32.mrb[0].mxu0
      %v1270 = vpop.f32.mrb[0].mxu0
      %v1271 = vpop.f32.mrb[0].mxu0
      %1272 = vdwg.mxu0
      %v1273 = vadd.f32 %v1155, %v1227
      %v1274 = vadd.f32 %v1156, %v1229
      %v1275 = vadd.f32 %v1157, %v1268
      %s1276 = scalar_lea.vmem %s1, 14
      %v1277 = vld [vmem:[%s1276] sm:$0x3]
      %1278 = vrot.lane.b32.xlu0 %v463, 91
      %v1279 = vpop.permute.xlu0 %1278
      %1280 = vrot.lane.b32.xlu0 %v464, 91
      %v1281 = vpop.permute.xlu0 %1280
      %1282 = vrot.lane.b32.xlu0 %v465, 91
      %v1283 = vpop.permute.xlu0 %1282
      %1284 = vrot.lane.b32.xlu0 %v466, 91
      %v1285 = vpop.permute.xlu0 %1284
      %1286 = vrot.lane.b32.xlu0 %v467, 91
      %v1287 = vpop.permute.xlu0 %1286
      %1288 = vrot.lane.b32.xlu0 %v468, 91
      %v1289 = vpop.permute.xlu0 %1288
      %vm1290 = vcmask 744448
      %v1291 = vsel %vm1290, %v1279, %v1281
      %v1292 = vsel %vm1290, %v1281, %v1283
      %v1293 = vsel %vm1290, %v1285, %v1287
      %v1294 = vsel %vm1290, %v1287, %v1289
      %v1299 = vsel %vm498, %v1277, 0
      %v1302 = vsel %vm502, %v1293, 0
      %v1305 = vsel %vm502, %v1294, 0
      %v1308 = vsel %vm502, %v1289, 0
      %1310 = vmatprep.subr.bf16.mxu0 %v1292
      %1311 = vmatpush1.bf16.msra.mxu0 %v1291
      %1312 = vmatprep.subr.bf16.mxu0 %v1305
      %1313 = vmatpush1.bf16.msra.mxu0 %v1302
      %1314 = vmatprep.subr.bf16.mxu0 0
      %1315 = vmatpush1.bf16.msra.mxu0 0
      %1316 = vmatprep.subr.bf16.mxu0 0
      %1317 = vmatpush1.bf16.msra.mxu0 0
      %1318 = vmatprep.subr.bf16.mxu0 0
      %1319 = vmatpush1.bf16.msra.mxu0 0
      %1320 = vmatprep.subr.bf16.mxu0 0
      %1321 = vmatpush1.bf16.msra.mxu0 0
      %1322 = vmatprep.subr.bf16.mxu0 0
      %1323 = vmatpush1.bf16.msra.mxu0 0
      %1324 = vmatprep.subr.bf16.mxu0 0
      %1325 = vmatpush1.bf16.msra.mxu0 0
      %1326 = vmatprep.subr.bf16.mxu0 0
      %1327 = vmatpush1.bf16.msra.mxu0 0
      %1328 = vmatprep.subr.bf16.mxu0 0
      %1329 = vmatpush1.bf16.msra.mxu0 0
      %1330 = vmatprep.subr.bf16.mxu0 0
      %1331 = vmatpush1.bf16.msra.mxu0 0
      %1332 = vmatprep.subr.bf16.mxu0 0
      %1333 = vmatpush1.bf16.msra.mxu0 0
      %1334 = vmatprep.subr.bf16.mxu0 0
      %1335 = vmatpush1.bf16.msra.mxu0 0
      %1336 = vmatprep.subr.bf16.mxu0 0
      %1337 = vmatpush1.bf16.msra.mxu0 0
      %1338 = vmatprep.subr.bf16.mxu0 0
      %1339 = vmatpush1.bf16.msra.mxu0 0
      %1340 = vmatprep.subr.bf16.mxu0 0
      %1341 = vmatpush1.bf16.msra.mxu0 0
      %1342 = vmatprep.mubr.bf16.mxu0 0
      %1343 = vmatmul.mubr.bf16.gmra.mrb[0].mxu0 %v1299
      %v1344 = vpop.f32.mrb[0].mxu0
      %v1345 = vadd.f32 0.0, %v1344
      %v1346 = vpop.f32.mrb[0].mxu0
      %v1347 = vadd.f32 0.0, %v1346
      %v1348 = vpop.f32.mrb[0].mxu0
      %v1349 = vpop.f32.mrb[0].mxu0
      %1350 = vdwg.mxu0
      %1351 = vmatprep.subr.bf16.mxu0 0
      %1352 = vmatpush1.bf16.msra.mxu0 %v1283
      %1353 = vmatprep.subr.bf16.mxu0 0
      %1354 = vmatpush1.bf16.msra.mxu0 %v1308
      %1355 = vmatprep.subr.bf16.mxu0 0
      %1356 = vmatpush1.bf16.msra.mxu0 0
      %1357 = vmatprep.subr.bf16.mxu0 0
      %1358 = vmatpush1.bf16.msra.mxu0 0
      %1359 = vmatprep.subr.bf16.mxu0 0
      %1360 = vmatpush1.bf16.msra.mxu0 0
      %1361 = vmatprep.subr.bf16.mxu0 0
      %1362 = vmatpush1.bf16.msra.mxu0 0
      %1363 = vmatprep.subr.bf16.mxu0 0
      %1364 = vmatpush1.bf16.msra.mxu0 0
      %1365 = vmatprep.subr.bf16.mxu0 0
      %1366 = vmatpush1.bf16.msra.mxu0 0
      %1367 = vmatprep.subr.bf16.mxu0 0
      %1368 = vmatpush1.bf16.msra.mxu0 0
      %1369 = vmatprep.subr.bf16.mxu0 0
      %1370 = vmatpush1.bf16.msra.mxu0 0
      %1371 = vmatprep.subr.bf16.mxu0 0
      %1372 = vmatpush1.bf16.msra.mxu0 0
      %1373 = vmatprep.subr.bf16.mxu0 0
      %1374 = vmatpush1.bf16.msra.mxu0 0
      %1375 = vmatprep.subr.bf16.mxu0 0
      %1376 = vmatpush1.bf16.msra.mxu0 0
      %1377 = vmatprep.subr.bf16.mxu0 0
      %1378 = vmatpush1.bf16.msra.mxu0 0
      %1379 = vmatprep.subr.bf16.mxu0 0
      %1380 = vmatpush1.bf16.msra.mxu0 0
      %1381 = vmatprep.subr.bf16.mxu0 0
      %1382 = vmatpush1.bf16.msra.mxu0 0
      %1383 = vmatprep.mubr.bf16.mxu0 0
      %1384 = vmatmul.mubr.bf16.gmra.mrb[0].mxu0 %v1299
      %v1385 = vpop.f32.mrb[0].mxu0
      %v1386 = vadd.f32 0.0, %v1385
      %v1387 = vpop.f32.mrb[0].mxu0
      %v1388 = vpop.f32.mrb[0].mxu0
      %v1389 = vpop.f32.mrb[0].mxu0
      %1390 = vdwg.mxu0
      %v1391 = vadd.f32 %v1273, %v1345
      %v1392 = vadd.f32 %v1274, %v1347
      %v1393 = vadd.f32 %v1275, %v1386
      %s1394 = scalar_lea.vmem %s1, 16
      %v1395 = vld [vmem:[%s1394] sm:$0x3]
      %1396 = vrot.lane.b32.xlu0 %v463, 90
      %v1397 = vpop.permute.xlu0 %1396
      %1398 = vrot.lane.b32.xlu0 %v464, 90
      %v1399 = vpop.permute.xlu0 %1398
      %1400 = vrot.lane.b32.xlu0 %v465, 90
      %v1401 = vpop.permute.xlu0 %1400
      %1402 = vrot.lane.b32.xlu0 %v466, 90
      %v1403 = vpop.permute.xlu0 %1402
      %1404 = vrot.lane.b32.xlu0 %v467, 90
      %v1405 = vpop.permute.xlu0 %1404
      %1406 = vrot.lane.b32.xlu0 %v468, 90
      %v1407 = vpop.permute.xlu0 %1406
      %vm1408 = vcmask 736256
      %v1409 = vsel %vm1408, %v1397, %v1399
      %v1410 = vsel %vm1408, %v1399, %v1401
      %v1411 = vsel %vm1408, %v1403, %v1405
      %v1412 = vsel %vm1408, %v1405, %v1407
      %v1417 = vsel %vm498, %v1395, 0
      %v1420 = vsel %vm502, %v1411, 0
      %v1423 = vsel %vm502, %v1412, 0
      %v1426 = vsel %vm502, %v1407, 0
      %1428 = vmatprep.subr.bf16.mxu0 %v1410
      %1429 = vmatpush1.bf16.msra.mxu0 %v1409
      %1430 = vmatprep.subr.bf16.mxu0 %v1423
      %1431 = vmatpush1.bf16.msra.mxu0 %v1420
      %1432 = vmatprep.subr.bf16.mxu0 0
      %1433 = vmatpush1.bf16.msra.mxu0 0
      %1434 = vmatprep.subr.bf16.mxu0 0
      %1435 = vmatpush1.bf16.msra.mxu0 0
      %1436 = vmatprep.subr.bf16.mxu0 0
      %1437 = vmatpush1.bf16.msra.mxu0 0
      %1438 = vmatprep.subr.bf16.mxu0 0
      %1439 = vmatpush1.bf16.msra.mxu0 0
      %1440 = vmatprep.subr.bf16.mxu0 0
      %1441 = vmatpush1.bf16.msra.mxu0 0
      %1442 = vmatprep.subr.bf16.mxu0 0
      %1443 = vmatpush1.bf16.msra.mxu0 0
      %1444 = vmatprep.subr.bf16.mxu0 0
      %1445 = vmatpush1.bf16.msra.mxu0 0
      %1446 = vmatprep.subr.bf16.mxu0 0
      %1447 = vmatpush1.bf16.msra.mxu0 0
      %1448 = vmatprep.subr.bf16.mxu0 0
      %1449 = vmatpush1.bf16.msra.mxu0 0
      %1450 = vmatprep.subr.bf16.mxu0 0
      %1451 = vmatpush1.bf16.msra.mxu0 0
      %1452 = vmatprep.subr.bf16.mxu0 0
      %1453 = vmatpush1.bf16.msra.mxu0 0
      %1454 = vmatprep.subr.bf16.mxu0 0
      %1455 = vmatpush1.bf16.msra.mxu0 0
      %1456 = vmatprep.subr.bf16.mxu0 0
      %1457 = vmatpush1.bf16.msra.mxu0 0
      %1458 = vmatprep.subr.bf16.mxu0 0
      %1459 = vmatpush1.bf16.msra.mxu0 0
      %1460 = vmatprep.mubr.bf16.mxu0 0
      %1461 = vmatmul.mubr.bf16.gmra.mrb[0].mxu0 %v1417
      %v1462 = vpop.f32.mrb[0].mxu0
      %v1463 = vadd.f32 0.0, %v1462
      %v1464 = vpop.f32.mrb[0].mxu0
      %v1465 = vadd.f32 0.0, %v1464
      %v1466 = vpop.f32.mrb[0].mxu0
      %v1467 = vpop.f32.mrb[0].mxu0
      %1468 = vdwg.mxu0
      %1469 = vmatprep.subr.bf16.mxu0 0
      %1470 = vmatpush1.bf16.msra.mxu0 %v1401
      %1471 = vmatprep.subr.bf16.mxu0 0
      %1472 = vmatpush1.bf16.msra.mxu0 %v1426
      %1473 = vmatprep.subr.bf16.mxu0 0
      %1474 = vmatpush1.bf16.msra.mxu0 0
      %1475 = vmatprep.subr.bf16.mxu0 0
      %1476 = vmatpush1.bf16.msra.mxu0 0
      %1477 = vmatprep.subr.bf16.mxu0 0
      %1478 = vmatpush1.bf16.msra.mxu0 0
      %1479 = vmatprep.subr.bf16.mxu0 0
      %1480 = vmatpush1.bf16.msra.mxu0 0
      %1481 = vmatprep.subr.bf16.mxu0 0
      %1482 = vmatpush1.bf16.msra.mxu0 0
      %1483 = vmatprep.subr.bf16.mxu0 0
      %1484 = vmatpush1.bf16.msra.mxu0 0
      %1485 = vmatprep.subr.bf16.mxu0 0
      %1486 = vmatpush1.bf16.msra.mxu0 0
      %1487 = vmatprep.subr.bf16.mxu0 0
      %1488 = vmatpush1.bf16.msra.mxu0 0
      %1489 = vmatprep.subr.bf16.mxu0 0
      %1490 = vmatpush1.bf16.msra.mxu0 0
      %1491 = vmatprep.subr.bf16.mxu0 0
      %1492 = vmatpush1.bf16.msra.mxu0 0
      %1493 = vmatprep.subr.bf16.mxu0 0
      %1494 = vmatpush1.bf16.msra.mxu0 0
      %1495 = vmatprep.subr.bf16.mxu0 0
      %1496 = vmatpush1.bf16.msra.mxu0 0
      %1497 = vmatprep.subr.bf16.mxu0 0
      %1498 = vmatpush1.bf16.msra.mxu0 0
      %1499 = vmatprep.subr.bf16.mxu0 0
      %1500 = vmatpush1.bf16.msra.mxu0 0
      %1501 = vmatprep.mubr.bf16.mxu0 0
      %1502 = vmatmul.mubr.bf16.gmra.mrb[0].mxu0 %v1417
      %v1503 = vpop.f32.mrb[0].mxu0
      %v1504 = vadd.f32 0.0, %v1503
      %v1505 = vpop.f32.mrb[0].mxu0
      %v1506 = vpop.f32.mrb[0].mxu0
      %v1507 = vpop.f32.mrb[0].mxu0
      %1508 = vdwg.mxu0
      %v1509 = vadd.f32 %v1391, %v1463
      %v1510 = vadd.f32 %v1392, %v1465
      %v1511 = vadd.f32 %v1393, %v1504
      %v1514 = vcombine.low %v1509, %v1510
      %1516 = vst [vmem:[%s143] sm:$0xff] %v1514
      %vm1517 = vcmask 257024
      %1518 = vst.msk [vmem:[%s143 + $0x8] sm:$0xf] %vm1517, %v1511
      %p1519 = scmp.lt.s32.totalorder %s13, 1
      %s1520 = scalar_select %p1519, %s13, 1
      %s1521 = smul.addr %s1520, 3
      %s1522 = smul.addr %s1521, 4
      %s1523 = scalar_lea.vmem %s2, %s1522
      // Predicated region
      $region29: #{basic_block_forward.4} parent=27 // pred_check
        %p1524 = pneg %p78
      $region30: #{basic_block_forward.4} parent=27 // pred_check_branch
        %1526 = sbr.rel (%p1524) target = $region32
      $region31: #{basic_block_forward.4} parent=27 // pred_region
        _
      $region32: #{basic_block_forward.4} parent=27 // pred_fallthru
        _
    $region28: #{basic_block_forward.4} parent=5 // pred_fallthru
      _
    %p1527 = scmp.le.s32.totalorder 2, %s8
    // Predicated region
    $region33: #{basic_block_forward.4} parent=5 // pred_check
      %p1528 = pneg %p1527
    $region34: #{basic_block_forward.4} parent=5 // pred_check_branch
      %1530 = sbr.rel (%p1528) target = $region36
    $region35: #{basic_block_forward.4} parent=5 // pred_region
      %s1531 = ssub.s32 %s8, 2
      // Predicated region
      $region37: #{basic_block_forward.4} parent=35 // pred_check
        %p1532 = pneg %p84
      $region38: #{basic_block_forward.4} parent=35 // pred_check_branch
        %1534 = sbr.rel (%p1532) target = $region40
      $region39: #{basic_block_forward.4} parent=35 // pred_region
        %p1535 = scmp.lt.s32.totalorder %s14, 1
        %s1536 = scalar_select %p1535, %s14, 1
        %s1537 = smul.addr %s1536, 3
        %s1538 = smul.addr %s1537, 4
        %s1539 = scalar_lea.vmem %s2, %s1538
      $region40: #{basic_block_forward.4} parent=35 // pred_fallthru
        _
    $region36: #{basic_block_forward.4} parent=5 // pred_fallthru
      _
  $region6: #{basic_block_forward.4} parent=0 // loop_footer
    %s12 = sadd.s32 1, %s8
  $region7: #{basic_block_forward.4} parent=0 // loop_footer_branch
    %7 = sbr.rel target = $region3
  $region8: #{basic_block_forward.4} parent=0 // loop_exit
    _

</llo_original>
